<compile_context>
chip_gen: v5e
topology: v5e:2x2
jax: 0.10.0
libtpu: 0.0.40
codegen_flags: <defaults>
</compile_context>

<pallas_src>
import functools

import numpy as np
import jax
import jax.numpy as jnp
from jax.experimental import pallas as pl
from jax.experimental.pallas import tpu as pltpu


def _round_up(x, m):
    return (x + m - 1) // m * m


def _silu(y):
    return y * jax.nn.sigmoid(y)


# ----------------------------------------------------------------- lane-shift strategy
# The 3x3 taps are static shifts along the flattened-spatial (lane) axis of a zero-padded
# canvas.  Fast path: pltpu.roll (XLU rotate, off the VPU/store path).  The rotation
# convention and lowering support are verified ONCE at import time on a representative
# (8, 384) f32 operand; if roll is unavailable we fall back to concat-of-slices shifts.

def _probe_shift_mode():
    try:
        mp = 384
        x = jnp.tile(jnp.arange(mp, dtype=jnp.float32)[None, :], (8, 1))

        def probe_kernel(x_ref, o_ref):
            r = pltpu.roll(x_ref[...], 365, axis=1)   # large shift (crosses vregs)
            o_ref[...] = pltpu.roll(r, 1, axis=1)     # small shift

        y = pl.pallas_call(
            probe_kernel,
            out_shape=jax.ShapeDtypeStruct((8, mp), jnp.float32),
        )(x)
        y = np.asarray(jax.device_get(y))
        xr = np.asarray(jax.device_get(x))
        if np.array_equal(y, np.roll(xr, 366, axis=1)):
            return "roll"        # pltpu.roll follows jnp.roll semantics
        if np.array_equal(y, np.roll(xr, -366, axis=1)):
            return "roll_rev"    # opposite rotation convention
    except Exception:
        pass
    return "concat"


_SHIFT_MODE = _probe_shift_mode()


def _lane_shift(a, delta, total):
    """out[:, p] = a[:, (p + delta) % total]  (static shift along the lane axis).

    For interior (non-pad) output positions the wrap never triggers, so this is an exact
    neighbour read; wrapped garbage only lands on ring/tail positions, masked afterwards.
    """
    d = delta % total
    if d == 0:
        return a
    if _SHIFT_MODE == "roll":
        return pltpu.roll(a, total - d, axis=1)
    if _SHIFT_MODE == "roll_rev":
        return pltpu.roll(a, d, axis=1)
    return jnp.concatenate([a[:, d:], a[:, :d]], axis=1)


# ----------------------------------------------------------------- fused C2f kernel

def _c2f_fused_kernel(*refs, cp, n, wp, mp, shortcut):
    """Fused C2f forward for one image on a zero-padded, lane-padded canvas.

    refs = (x, mask, w1, b1, w2, b2, [wa_i, ba_i, wb_i, bb_i] * n, out)
      x     : (1, C1p, mp)   bf16, zero pad ring + zero lane tail
      mask  : (1, mp)        f32, 1 at interior positions, 0 on ring/tail
      w1    : (2*cp, C1p)    bf16 cv1 weight (BN folded); the two chunks pre-separated
                             into sublane-aligned row groups
      b1    : (2*cp, 1)      f32
      w2    : (2+n, C2p, cp) bf16 cv2 weight, split per concat chunk
      b2    : (C2p, 1)       f32
      wa,wb : (9, cp, cp)    bf16 3x3 weights per tap (BN folded)
      ba,bb : (cp, 1)        f32
      out   : (1, C2p, mp)   bf16 canvas (interior sliced out in the wrapper)
    """
    x_ref, mask_ref, w1_ref, b1_ref, w2_ref, b2_ref = refs[:6]
    m_refs = refs[6:6 + 4 * n]
    o_ref = refs[6 + 4 * n]

    x = x_ref[0]                      # (C1p, mp) bf16
    mask = mask_ref[...]              # (1, mp)   f32

    # cv1: 1x1 conv + bias + SiLU; re-zero ring/tail so the 3x3 taps read zeros there.
    y = jnp.dot(w1_ref[...], x, preferred_element_type=jnp.float32)      # (2cp, mp)
    y = _silu(y + b1_ref[...]) * mask
    ys = [y[:cp], y[cp:]]             # f32; cp % 8 == 0 -> tile-aligned sublane slices

    def conv3x3(a, w_ref, b_ref):
        # 3x3 / stride 1 / pad 1 only.  Per-tap accumulation (no 9x im2col copy).
        # Rolls stay on the 32-bit activation (well-supported XLU path); each rolled tap
        # is cast to bf16 only for the MXU push, accumulation stays f32.
        acc = None
        t = 0
        for dy in (-1, 0, 1):
            for dx in (-1, 0, 1):
                tap = _lane_shift(a, dy * wp + dx, mp).astype(jnp.bfloat16)
                d = jnp.dot(w_ref[t], tap, preferred_element_type=jnp.float32)
                acc = d if acc is None else acc + d
                t += 1
        return _silu(acc + b_ref[...]) * mask                             # (cp, mp) f32

    for i in range(n):
        wa_ref, ba_ref, wb_ref, bb_ref = m_refs[4 * i:4 * i + 4]
        t1 = conv3x3(ys[-1], wa_ref, ba_ref)
        t2 = conv3x3(t1, wb_ref, bb_ref)
        if shortcut:                  # Bottleneck.add (static)
            t2 = ys[-1] + t2
        ys.append(t2)

    # cv2: 1x1 conv accumulated chunk-by-chunk (no channel-axis concat).
    acc = None
    for j, yj in enumerate(ys):
        d = jnp.dot(w2_ref[j], yj.astype(jnp.bfloat16),
                    preferred_element_type=jnp.float32)
        acc = d if acc is None else acc + d
    o_ref[0] = _silu(acc + b2_ref[...]).astype(jnp.bfloat16)


# ----------------------------------------------------------------- pallas wrapper

def _c2f_pallas(xp, mask, w1, b1, w2, b2, m_weights, *, cp, n, wp, shortcut):
    N, C1p, MP = xp.shape
    C2p = w2.shape[1]

    in_specs = [
        pl.BlockSpec((1, C1p, MP), lambda i: (i, 0, 0)),   # per-image activation canvas
        pl.BlockSpec(mask.shape, lambda i: (0, 0)),        # interior mask
        pl.BlockSpec(w1.shape, lambda i: (0, 0)),
        pl.BlockSpec(b1.shape, lambda i: (0, 0)),
        pl.BlockSpec(w2.shape, lambda i: (0, 0, 0)),
        pl.BlockSpec(b2.shape, lambda i: (0, 0)),
    ]
    args = [xp, mask, w1, b1, w2, b2]
    for arr in m_weights:
        if arr.ndim == 3:
            in_specs.append(pl.BlockSpec(arr.shape, lambda i: (0, 0, 0)))
        else:
            in_specs.append(pl.BlockSpec(arr.shape, lambda i: (0, 0)))
        args.append(arr)

    kernel = functools.partial(
        _c2f_fused_kernel, cp=cp, n=n, wp=wp, mp=MP, shortcut=shortcut)

    return pl.pallas_call(
        kernel,
        out_shape=jax.ShapeDtypeStruct((N, C2p, MP), jnp.bfloat16),
        grid=(N,),
        in_specs=in_specs,
        out_specs=pl.BlockSpec((1, C2p, MP), lambda i: (i, 0, 0)),
        compiler_params=pltpu.CompilerParams(
            dimension_semantics=("parallel",)),             # megacore: images across TCs
    )(*args)


# ----------------------------------------------------------------- parameters

def _fold_bn(gamma, beta, mean, var, eps=1e-5):
    scale = gamma / jnp.sqrt(var + eps)
    bias = beta - mean * scale
    return scale, bias


def _init_conv_bn(key, cin, cout, k):
    """Deterministic synthetic init for a Conv(c1,c2,k) block (conv w/o bias + BN)."""
    k_w, k_g, k_b, k_m, k_v = jax.random.split(key, 5)
    if k == 1:
        w = 0.2 * jax.random.normal(k_w, (cin, cout), dtype=jnp.float32)
    else:
        w = 0.2 * jax.random.normal(k_w, (k, k, cin, cout), dtype=jnp.float32)
    gamma = 1.0 + 0.1 * jax.random.normal(k_g, (cout,), dtype=jnp.float32)
    beta = 0.05 * jax.random.normal(k_b, (cout,), dtype=jnp.float32)
    mean = 0.1 * jax.random.normal(k_m, (cout,), dtype=jnp.float32)
    var = 1.0 + 0.1 * jnp.abs(jax.random.normal(k_v, (cout,), dtype=jnp.float32))
    scale, bias = _fold_bn(gamma, beta, mean, var)
    return {"w": w, "s": scale, "b": bias}


def init_c2f_params(key, c1, c2, n=1, e=0.5):
    c = int(c2 * e)
    keys = jax.random.split(key, 2 + 2 * n)
    params = {
        # No Python ints inside the pytree (they would become tracers under jit).
        "cv1": _init_conv_bn(keys[0], c1, 2 * c, 1),
        "cv2": _init_conv_bn(keys[1], (2 + n) * c, c2, 1),
        "m": [],
    }
    for i in range(n):
        params["m"].append({
            "cv1": _init_conv_bn(keys[2 + 2 * i], c, c, 3),   # Bottleneck.cv1 (3x3), e=1.0
            "cv2": _init_conv_bn(keys[3 + 2 * i], c, c, 3),   # Bottleneck.cv2 (3x3)
        })
    return params


# ----------------------------------------------------------------- forward

@functools.partial(jax.jit, static_argnames=("shortcut",))
def c2f_forward(x_nchw, params, shortcut=False):
    """C2f.forward.  x_nchw: (N, c1, H, W) -> (N, c2, H, W)."""
    x = x_nchw.astype(jnp.float32)
    N, C1, H, W = x.shape
    n = len(params["m"])                               # static (pytree structure)
    c = params["cv1"]["s"].shape[0] // 2               # static (array shape)
    C2 = params["cv2"]["s"].shape[0]
    Hp, Wp = H + 2, W + 2
    Mp = Hp * Wp
    MP = _round_up(Mp, 128)                            # lane-dense canvas width
    cp = _round_up(c, 8)                               # sublane-aligned channel group
    C1p = _round_up(C1, 8)
    C2p = _round_up(C2, 8)

    def _pad_mat(m, rows, cols):
        return jnp.pad(m, ((0, rows - m.shape[0]), (0, cols - m.shape[1])))

    def _pad_vec(v, size):
        return jnp.pad(v, (0, size - v.shape[0]))

    # cv1: fold BN scale; pre-separate the two output chunks into sublane-aligned groups.
    wt = (params["cv1"]["w"] * params["cv1"]["s"][None, :]).T               # (2c, C1)
    w1 = jnp.concatenate([_pad_mat(wt[:c], cp, C1p),
                          _pad_mat(wt[c:], cp, C1p)], axis=0).astype(jnp.bfloat16)
    b1 = jnp.concatenate([_pad_vec(params["cv1"]["b"][:c], cp),
                          _pad_vec(params["cv1"]["b"][c:], cp)]
                         ).reshape(-1, 1).astype(jnp.float32)

    # cv2: fold BN scale; split per concat chunk for in-kernel incremental accumulation.
    wt2 = (params["cv2"]["w"] * params["cv2"]["s"][None, :]).T              # (C2, (2+n)c)
    w2 = jnp.stack([_pad_mat(wt2[:, j * c:(j + 1) * c], C2p, cp)
                    for j in range(2 + n)]).astype(jnp.bfloat16)
    b2 = _pad_vec(params["cv2"]["b"], C2p).reshape(-1, 1).astype(jnp.float32)

    def prep_3x3(p):
        # The kernel's lane-shift tap trick is valid only for 3x3 / stride 1 / pad 1.
        assert p["w"].shape[:2] == (3, 3), "kernel supports 3x3/stride1/pad1 only"
        w = p["w"] * p["s"][None, None, None, :]                            # (3,3,cin,cout)
        w = jnp.transpose(w, (0, 1, 3, 2)).reshape(9, c, c)                 # (tap,cout,cin)
        w = jnp.pad(w, ((0, 0), (0, cp - c), (0, cp - c))).astype(jnp.bfloat16)
        b = _pad_vec(p["b"], cp).reshape(-1, 1).astype(jnp.float32)
        return w, b

    m_weights = []
    for blk in params["m"]:
        wa, ba = prep_3x3(blk["cv1"])
        wb, bb = prep_3x3(blk["cv2"])
        m_weights += [wa, ba, wb, bb]

    # Activations: zero-padded canvas; channels -> sublanes (padded to 8), flattened
    # padded spatial -> lanes, tail-padded to a multiple of 128 (dense vregs/stores).
    xp = jnp.pad(x, ((0, 0), (0, C1p - C1), (1, 1), (1, 1))).reshape(N, C1p, Mp)
    xp = jnp.pad(xp, ((0, 0), (0, 0), (0, MP - Mp))).astype(jnp.bfloat16)
    mask = jnp.pad(jnp.ones((H, W), jnp.float32), ((1, 1), (1, 1))).reshape(1, Mp)
    mask = jnp.pad(mask, ((0, 0), (0, MP - Mp)))

    # TODO(synk): for large feature maps, add a 'parallel' spatial row-tile grid axis
    # (with a 2n-row halo per tile) so per-step VMEM fits v7x's 64 MiB / default scoped
    # limits and both v7x TensorCores stay busy even at batch 1.
    out = _c2f_pallas(xp, mask, w1, b1, w2, b2, m_weights,
                      cp=cp, n=n, wp=Wp, shortcut=shortcut)
    # Slice the interior of the bf16 output canvas: already NCHW.
    out = out[:, :C2, :Mp].reshape(N, C2, Hp, Wp)[:, :, 1:H + 1, 1:W + 1]
    return out.astype(jnp.float32)


# ----------------------------------------------------------------- pure-JAX reference

def _conv_bn_silu_ref(x, w, s, b, k):
    if k == 1:
        w4 = w.T[:, :, None, None]                     # (Cout, Cin, 1, 1)
        pad = ((0, 0), (0, 0))
    else:
        w4 = jnp.transpose(w, (3, 2, 0, 1))            # (Cout, Cin, 3, 3)
        pad = ((1, 1), (1, 1))
    y = jax.lax.conv_general_dilated(
        x, w4, window_strides=(1, 1), padding=pad,
        dimension_numbers=("NCHW", "OIHW", "NCHW"))
    y = y * s[None, :, None, None] + b[None, :, None, None]
    return y * jax.nn.sigmoid(y)


def _c2f_ref(x, params, shortcut=False):
    c = params["cv1"]["s"].shape[0] // 2
    y = _conv_bn_silu_ref(x, params["cv1"]["w"], params["cv1"]["s"], params["cv1"]["b"], 1)
    ys = [y[:, :c], y[:, c:]]
    for blk in params["m"]:
        t = _conv_bn_silu_ref(ys[-1], blk["cv1"]["w"], blk["cv1"]["s"], blk["cv1"]["b"], 3)
        t = _conv_bn_silu_ref(t, blk["cv2"]["w"], blk["cv2"]["s"], blk["cv2"]["b"], 3)
        if shortcut:
            t = ys[-1] + t
        ys.append(t)
    cat = jnp.concatenate(ys, axis=1)
    return _conv_bn_silu_ref(cat, params["cv2"]["w"], params["cv2"]["s"], params["cv2"]["b"], 1)


# ----------------------------------------------------------------- main

if __name__ == "__main__":
    key = jax.random.PRNGKey(0)
    k_x, k_p = jax.random.split(key)

    N, C1, H, W = 2, 4, 16, 16
    C2, n = 8, 1

    x = jax.random.normal(k_x, (N, C1, H, W), dtype=jnp.float32)
    params = init_c2f_params(k_p, C1, C2, n=n, e=0.5)

    out = c2f_forward(x, params, shortcut=False)
    jax.block_until_ready(out)

    assert out.shape == (N, C2, H, W), out.shape
    assert bool(jnp.all(jnp.isfinite(out)))

    # Numerical check vs f32 XLA reference.  bf16 MXU operands + bf16 output canvas
    # -> loose tolerance (measured error is well under this bound).
    ref = _c2f_ref(x, params, shortcut=False)
    max_err = float(jnp.max(jnp.abs(out - ref)))
    assert max_err < 0.15, f"max abs error vs reference: {max_err}"

    print("KERNEL_OK")
</pallas_src>

<mosaic_0001>
module attributes {stable_mosaic.version = 11 : i64} {
  func.func @probe_kernel(%arg0: memref<8x384xf32, #tpu.memory_space<vmem>>, %arg1: memref<8x384xf32, #tpu.memory_space<vmem>>) attributes {dimension_semantics = [], scalar_prefetch = 0 : i64, scratch_operands = 0 : i64, tpu.core_type = #tpu.core_type<tc>} {
    %c0 = arith.constant 0 : index
    %c0_0 = arith.constant 0 : index
    %0 = vector.load %arg0[%c0, %c0_0] : memref<8x384xf32, #tpu.memory_space<vmem>>, vector<8x384xf32>
    %c365_i32 = arith.constant 365 : i32
    %1 = tpu.dynamic_rotate %0 by %c365_i32 dim 1 : vector<8x384xf32>, i32 -> vector<8x384xf32>
    %c1_i32 = arith.constant 1 : i32
    %2 = tpu.dynamic_rotate %1 by %c1_i32 dim 1 : vector<8x384xf32>, i32 -> vector<8x384xf32>
    %c0_1 = arith.constant 0 : index
    %c0_2 = arith.constant 0 : index
    %3 = vector.load %arg1[%c0_1, %c0_2] : memref<8x384xf32, #tpu.memory_space<vmem>>, vector<8x384xf32>
    tpu.vector_store %arg1[%c0_1, %c0_2], %2 {strides = array<i32>} : memref<8x384xf32, #tpu.memory_space<vmem>>, vector<8x384xf32>,
    return
  }
}

module attributes {stable_mosaic.version = 11 : i64} {
  func.func @_c2f_fused_kernel(%arg0: i32, %arg1: memref<1x8x384xbf16, #tpu.memory_space<vmem>>, %arg2: memref<1x384xf32, #tpu.memory_space<vmem>>, %arg3: memref<16x8xbf16, #tpu.memory_space<vmem>>, %arg4: memref<16x1xf32, #tpu.memory_space<vmem>>, %arg5: memref<3x8x8xbf16, #tpu.memory_space<vmem>>, %arg6: memref<8x1xf32, #tpu.memory_space<vmem>>, %arg7: memref<9x8x8xbf16, #tpu.memory_space<vmem>>, %arg8: memref<8x1xf32, #tpu.memory_space<vmem>>, %arg9: memref<9x8x8xbf16, #tpu.memory_space<vmem>>, %arg10: memref<8x1xf32, #tpu.memory_space<vmem>>, %arg11: memref<1x8x384xbf16, #tpu.memory_space<vmem>>) attributes {dimension_semantics = [#tpu.dimension_semantics<parallel>], iteration_bounds = array<i64: 2>, scalar_prefetch = 0 : i64, scratch_operands = 0 : i64, tpu.core_type = #tpu.core_type<tc>, window_params = [{transform_indices = @transform_0, window_bounds = array<i64: 1, 8, 384>}, {pipeline_mode = #tpu.pipeline_mode<synchronous>, transform_indices = @transform_1, window_bounds = array<i64: 1, 384>}, {pipeline_mode = #tpu.pipeline_mode<synchronous>, transform_indices = @transform_2, window_bounds = array<i64: 16, 8>}, {pipeline_mode = #tpu.pipeline_mode<synchronous>, transform_indices = @transform_3, window_bounds = array<i64: 16, 1>}, {pipeline_mode = #tpu.pipeline_mode<synchronous>, transform_indices = @transform_4, window_bounds = array<i64: 3, 8, 8>}, {pipeline_mode = #tpu.pipeline_mode<synchronous>, transform_indices = @transform_5, window_bounds = array<i64: 8, 1>}, {pipeline_mode = #tpu.pipeline_mode<synchronous>, transform_indices = @transform_6, window_bounds = array<i64: 9, 8, 8>}, {pipeline_mode = #tpu.pipeline_mode<synchronous>, transform_indices = @transform_7, window_bounds = array<i64: 8, 1>}, {pipeline_mode = #tpu.pipeline_mode<synchronous>, transform_indices = @transform_8, window_bounds = array<i64: 9, 8, 8>}, {pipeline_mode = #tpu.pipeline_mode<synchronous>, transform_indices = @transform_9, window_bounds = array<i64: 8, 1>}, {transform_indices = @transform_10, window_bounds = array<i64: 1, 8, 384>}]} {
    %c0 = arith.constant 0 : index
    %c0_0 = arith.constant 0 : index
    %c0_1 = arith.constant 0 : index
    %0 = vector.load %arg1[%c0, %c0_0, %c0_1] : memref<1x8x384xbf16, #tpu.memory_space<vmem>>, vector<1x8x384xbf16>
    %1 = vector.shape_cast %0 : vector<1x8x384xbf16> to vector<8x384xbf16>
    %c0_2 = arith.constant 0 : index
    %c0_3 = arith.constant 0 : index
    %2 = vector.load %arg2[%c0_2, %c0_3] : memref<1x384xf32, #tpu.memory_space<vmem>>, vector<1x384xf32>
    %c0_4 = arith.constant 0 : index
    %c0_5 = arith.constant 0 : index
    %3 = vector.load %arg3[%c0_4, %c0_5] : memref<16x8xbf16, #tpu.memory_space<vmem>>, vector<16x8xbf16>
    %cst = arith.constant dense<0.000000e+00> : vector<16x384xf32>
    %4 = tpu.matmul %3, %1, %cst {dimension_numbers = #tpu.dot_dimension_numbers<[1], [0], [0], [1], [0, 0, 1, 1], [], []>} : vector<16x8xbf16>, vector<8x384xbf16>, vector<16x384xf32> -> vector<16x384xf32>
    %c0_6 = arith.constant 0 : index
    %c0_7 = arith.constant 0 : index
    %5 = vector.load %arg4[%c0_6, %c0_7] : memref<16x1xf32, #tpu.memory_space<vmem>>, vector<16x1xf32>
    %6 = vector.broadcast %5 : vector<16x1xf32> to vector<16x384xf32>
    %7 = arith.addf %4, %6 : vector<16x384xf32>
    %8 = arith.negf %7 : vector<16x384xf32>
    %9 = math.exp %8 : vector<16x384xf32>
    %cst_8 = arith.constant 1.000000e+00 : f32
    %10 = vector.broadcast %cst_8 : f32 to vector<16x384xf32>
    %11 = arith.addf %10, %9 : vector<16x384xf32>
    %12 = arith.divf %10, %11 : vector<16x384xf32>
    %13 = arith.mulf %7, %12 : vector<16x384xf32>
    %14 = vector.broadcast %2 : vector<1x384xf32> to vector<16x384xf32>
    %15 = arith.mulf %13, %14 : vector<16x384xf32>
    %16 = vector.extract_strided_slice %15 {offsets = [0, 0], sizes = [8, 384], strides = [1, 1]} : vector<16x384xf32> to vector<8x384xf32>
    %17 = vector.extract_strided_slice %15 {offsets = [8, 0], sizes = [8, 384], strides = [1, 1]} : vector<16x384xf32> to vector<8x384xf32>
    %18 = vector.extract_strided_slice %17 {offsets = [0, 365], sizes = [8, 19], strides = [1, 1]} : vector<8x384xf32> to vector<8x19xf32>
    %19 = vector.extract_strided_slice %17 {offsets = [0, 0], sizes = [8, 365], strides = [1, 1]} : vector<8x384xf32> to vector<8x365xf32>
    %20 = tpu.concatenate %18, %19 in 1 : vector<8x19xf32>, vector<8x365xf32> -> vector<8x384xf32>
    %21 = arith.truncf %20 : vector<8x384xf32> to vector<8x384xbf16>
    %c0_9 = arith.constant 0 : index
    %c0_10 = arith.constant 0 : index
    %c0_11 = arith.constant 0 : index
    %22 = vector.load %arg7[%c0_9, %c0_10, %c0_11] : memref<9x8x8xbf16, #tpu.memory_space<vmem>>, vector<1x8x8xbf16>
    %23 = vector.shape_cast %22 : vector<1x8x8xbf16> to vector<8x8xbf16>
    %cst_12 = arith.constant dense<0.000000e+00> : vector<8x384xf32>
    %24 = tpu.matmul %23, %21, %cst_12 {dimension_numbers = #tpu.dot_dimension_numbers<[1], [0], [0], [1], [0, 0, 1, 1], [], []>} : vector<8x8xbf16>, vector<8x384xbf16>, vector<8x384xf32> -> vector<8x384xf32>
    %25 = vector.extract_strided_slice %17 {offsets = [0, 366], sizes = [8, 18], strides = [1, 1]} : vector<8x384xf32> to vector<8x18xf32>
    %26 = vector.extract_strided_slice %17 {offsets = [0, 0], sizes = [8, 366], strides = [1, 1]} : vector<8x384xf32> to vector<8x366xf32>
    %27 = tpu.concatenate %25, %26 in 1 : vector<8x18xf32>, vector<8x366xf32> -> vector<8x384xf32>
    %28 = arith.truncf %27 : vector<8x384xf32> to vector<8x384xbf16>
    %c1 = arith.constant 1 : index
    %c0_13 = arith.constant 0 : index
    %c0_14 = arith.constant 0 : index
    %29 = vector.load %arg7[%c1, %c0_13, %c0_14] : memref<9x8x8xbf16, #tpu.memory_space<vmem>>, vector<1x8x8xbf16>
    %30 = vector.shape_cast %29 : vector<1x8x8xbf16> to vector<8x8xbf16>
    %cst_15 = arith.constant dense<0.000000e+00> : vector<8x384xf32>
    %31 = tpu.matmul %30, %28, %cst_15 {dimension_numbers = #tpu.dot_dimension_numbers<[1], [0], [0], [1], [0, 0, 1, 1], [], []>} : vector<8x8xbf16>, vector<8x384xbf16>, vector<8x384xf32> -> vector<8x384xf32>
    %32 = arith.addf %24, %31 : vector<8x384xf32>
    %33 = vector.extract_strided_slice %17 {offsets = [0, 367], sizes = [8, 17], strides = [1, 1]} : vector<8x384xf32> to vector<8x17xf32>
    %34 = vector.extract_strided_slice %17 {offsets = [0, 0], sizes = [8, 367], strides = [1, 1]} : vector<8x384xf32> to vector<8x367xf32>
    %35 = tpu.concatenate %33, %34 in 1 : vector<8x17xf32>, vector<8x367xf32> -> vector<8x384xf32>
    %36 = arith.truncf %35 : vector<8x384xf32> to vector<8x384xbf16>
    %c2 = arith.constant 2 : index
    %c0_16 = arith.constant 0 : index
    %c0_17 = arith.constant 0 : index
    %37 = vector.load %arg7[%c2, %c0_16, %c0_17] : memref<9x8x8xbf16, #tpu.memory_space<vmem>>, vector<1x8x8xbf16>
    %38 = vector.shape_cast %37 : vector<1x8x8xbf16> to vector<8x8xbf16>
    %cst_18 = arith.constant dense<0.000000e+00> : vector<8x384xf32>
    %39 = tpu.matmul %38, %36, %cst_18 {dimension_numbers = #tpu.dot_dimension_numbers<[1], [0], [0], [1], [0, 0, 1, 1], [], []>} : vector<8x8xbf16>, vector<8x384xbf16>, vector<8x384xf32> -> vector<8x384xf32>
    %40 = arith.addf %32, %39 : vector<8x384xf32>
    %41 = vector.extract_strided_slice %17 {offsets = [0, 383], sizes = [8, 1], strides = [1, 1]} : vector<8x384xf32> to vector<8x1xf32>
    %42 = vector.extract_strided_slice %17 {offsets = [0, 0], sizes = [8, 383], strides = [1, 1]} : vector<8x384xf32> to vector<8x383xf32>
    %43 = tpu.concatenate %41, %42 in 1 : vector<8x1xf32>, vector<8x383xf32> -> vector<8x384xf32>
    %44 = arith.truncf %43 : vector<8x384xf32> to vector<8x384xbf16>
    %c3 = arith.constant 3 : index
    %c0_19 = arith.constant 0 : index
    %c0_20 = arith.constant 0 : index
    %45 = vector.load %arg7[%c3, %c0_19, %c0_20] : memref<9x8x8xbf16, #tpu.memory_space<vmem>>, vector<1x8x8xbf16>
    %46 = vector.shape_cast %45 : vector<1x8x8xbf16> to vector<8x8xbf16>
    %cst_21 = arith.constant dense<0.000000e+00> : vector<8x384xf32>
    %47 = tpu.matmul %46, %44, %cst_21 {dimension_numbers = #tpu.dot_dimension_numbers<[1], [0], [0], [1], [0, 0, 1, 1], [], []>} : vector<8x8xbf16>, vector<8x384xbf16>, vector<8x384xf32> -> vector<8x384xf32>
    %48 = arith.addf %40, %47 : vector<8x384xf32>
    %49 = arith.truncf %17 : vector<8x384xf32> to vector<8x384xbf16>
    %c4 = arith.constant 4 : index
    %c0_22 = arith.constant 0 : index
    %c0_23 = arith.constant 0 : index
    %50 = vector.load %arg7[%c4, %c0_22, %c0_23] : memref<9x8x8xbf16, #tpu.memory_space<vmem>>, vector<1x8x8xbf16>
    %51 = vector.shape_cast %50 : vector<1x8x8xbf16> to vector<8x8xbf16>
    %cst_24 = arith.constant dense<0.000000e+00> : vector<8x384xf32>
    %52 = tpu.matmul %51, %49, %cst_24 {dimension_numbers = #tpu.dot_dimension_numbers<[1], [0], [0], [1], [0, 0, 1, 1], [], []>} : vector<8x8xbf16>, vector<8x384xbf16>, vector<8x384xf32> -> vector<8x384xf32>
    %53 = arith.addf %48, %52 : vector<8x384xf32>
    %54 = vector.extract_strided_slice %17 {offsets = [0, 1], sizes = [8, 383], strides = [1, 1]} : vector<8x384xf32> to vector<8x383xf32>
    %55 = vector.extract_strided_slice %17 {offsets = [0, 0], sizes = [8, 1], strides = [1, 1]} : vector<8x384xf32> to vector<8x1xf32>
    %56 = tpu.concatenate %54, %55 in 1 : vector<8x383xf32>, vector<8x1xf32> -> vector<8x384xf32>
    %57 = arith.truncf %56 : vector<8x384xf32> to vector<8x384xbf16>
    %c5 = arith.constant 5 : index
    %c0_25 = arith.constant 0 : index
    %c0_26 = arith.constant 0 : index
    %58 = vector.load %arg7[%c5, %c0_25, %c0_26] : memref<9x8x8xbf16, #tpu.memory_space<vmem>>, vector<1x8x8xbf16>
    %59 = vector.shape_cast %58 : vector<1x8x8xbf16> to vector<8x8xbf16>
    %cst_27 = arith.constant dense<0.000000e+00> : vector<8x384xf32>
    %60 = tpu.matmul %59, %57, %cst_27 {dimension_numbers = #tpu.dot_dimension_numbers<[1], [0], [0], [1], [0, 0, 1, 1], [], []>} : vector<8x8xbf16>, vector<8x384xbf16>, vector<8x384xf32> -> vector<8x384xf32>
    %61 = arith.addf %53, %60 : vector<8x384xf32>
    %62 = vector.extract_strided_slice %17 {offsets = [0, 17], sizes = [8, 367], strides = [1, 1]} : vector<8x384xf32> to vector<8x367xf32>
    %63 = vector.extract_strided_slice %17 {offsets = [0, 0], sizes = [8, 17], strides = [1, 1]} : vector<8x384xf32> to vector<8x17xf32>
    %64 = tpu.concatenate %62, %63 in 1 : vector<8x367xf32>, vector<8x17xf32> -> vector<8x384xf32>
    %65 = arith.truncf %64 : vector<8x384xf32> to vector<8x384xbf16>
    %c6 = arith.constant 6 : index
    %c0_28 = arith.constant 0 : index
    %c0_29 = arith.constant 0 : index
    %66 = vector.load %arg7[%c6, %c0_28, %c0_29] : memref<9x8x8xbf16, #tpu.memory_space<vmem>>, vector<1x8x8xbf16>
    %67 = vector.shape_cast %66 : vector<1x8x8xbf16> to vector<8x8xbf16>
    %cst_30 = arith.constant dense<0.000000e+00> : vector<8x384xf32>
    %68 = tpu.matmul %67, %65, %cst_30 {dimension_numbers = #tpu.dot_dimension_numbers<[1], [0], [0], [1], [0, 0, 1, 1], [], []>} : vector<8x8xbf16>, vector<8x384xbf16>, vector<8x384xf32> -> vector<8x384xf32>
    %69 = arith.addf %61, %68 : vector<8x384xf32>
    %70 = vector.extract_strided_slice %17 {offsets = [0, 18], sizes = [8, 366], strides = [1, 1]} : vector<8x384xf32> to vector<8x366xf32>
    %71 = vector.extract_strided_slice %17 {offsets = [0, 0], sizes = [8, 18], strides = [1, 1]} : vector<8x384xf32> to vector<8x18xf32>
    %72 = tpu.concatenate %70, %71 in 1 : vector<8x366xf32>, vector<8x18xf32> -> vector<8x384xf32>
    %73 = arith.truncf %72 : vector<8x384xf32> to vector<8x384xbf16>
    %c7 = arith.constant 7 : index
    %c0_31 = arith.constant 0 : index
    %c0_32 = arith.constant 0 : index
    %74 = vector.load %arg7[%c7, %c0_31, %c0_32] : memref<9x8x8xbf16, #tpu.memory_space<vmem>>, vector<1x8x8xbf16>
    %75 = vector.shape_cast %74 : vector<1x8x8xbf16> to vector<8x8xbf16>
    %cst_33 = arith.constant dense<0.000000e+00> : vector<8x384xf32>
    %76 = tpu.matmul %75, %73, %cst_33 {dimension_numbers = #tpu.dot_dimension_numbers<[1], [0], [0], [1], [0, 0, 1, 1], [], []>} : vector<8x8xbf16>, vector<8x384xbf16>, vector<8x384xf32> -> vector<8x384xf32>
    %77 = arith.addf %69, %76 : vector<8x384xf32>
    %78 = vector.extract_strided_slice %17 {offsets = [0, 19], sizes = [8, 365], strides = [1, 1]} : vector<8x384xf32> to vector<8x365xf32>
    %79 = vector.extract_strided_slice %17 {offsets = [0, 0], sizes = [8, 19], strides = [1, 1]} : vector<8x384xf32> to vector<8x19xf32>
    %80 = tpu.concatenate %78, %79 in 1 : vector<8x365xf32>, vector<8x19xf32> -> vector<8x384xf32>
    %81 = arith.truncf %80 : vector<8x384xf32> to vector<8x384xbf16>
    %c8 = arith.constant 8 : index
    %c0_34 = arith.constant 0 : index
    %c0_35 = arith.constant 0 : index
    %82 = vector.load %arg7[%c8, %c0_34, %c0_35] : memref<9x8x8xbf16, #tpu.memory_space<vmem>>, vector<1x8x8xbf16>
    %83 = vector.shape_cast %82 : vector<1x8x8xbf16> to vector<8x8xbf16>
    %cst_36 = arith.constant dense<0.000000e+00> : vector<8x384xf32>
    %84 = tpu.matmul %83, %81, %cst_36 {dimension_numbers = #tpu.dot_dimension_numbers<[1], [0], [0], [1], [0, 0, 1, 1], [], []>} : vector<8x8xbf16>, vector<8x384xbf16>, vector<8x384xf32> -> vector<8x384xf32>
    %85 = arith.addf %77, %84 : vector<8x384xf32>
    %c0_37 = arith.constant 0 : index
    %c0_38 = arith.constant 0 : index
    %86 = vector.load %arg8[%c0_37, %c0_38] : memref<8x1xf32, #tpu.memory_space<vmem>>, vector<8x1xf32>
    %87 = vector.broadcast %86 : vector<8x1xf32> to vector<8x384xf32>
    %88 = arith.addf %85, %87 : vector<8x384xf32>
    %89 = arith.negf %88 : vector<8x384xf32>
    %90 = math.exp %89 : vector<8x384xf32>
    %cst_39 = arith.constant 1.000000e+00 : f32
    %91 = vector.broadcast %cst_39 : f32 to vector<8x384xf32>
    %92 = arith.addf %91, %90 : vector<8x384xf32>
    %93 = arith.divf %91, %92 : vector<8x384xf32>
    %94 = arith.mulf %88, %93 : vector<8x384xf32>
    %95 = vector.broadcast %2 : vector<1x384xf32> to vector<8x384xf32>
    %96 = arith.mulf %94, %95 : vector<8x384xf32>
    %97 = vector.extract_strided_slice %96 {offsets = [0, 365], sizes = [8, 19], strides = [1, 1]} : vector<8x384xf32> to vector<8x19xf32>
    %98 = vector.extract_strided_slice %96 {offsets = [0, 0], sizes = [8, 365], strides = [1, 1]} : vector<8x384xf32> to vector<8x365xf32>
    %99 = tpu.concatenate %97, %98 in 1 : vector<8x19xf32>, vector<8x365xf32> -> vector<8x384xf32>
    %100 = arith.truncf %99 : vector<8x384xf32> to vector<8x384xbf16>
    %c0_40 = arith.constant 0 : index
    %c0_41 = arith.constant 0 : index
    %c0_42 = arith.constant 0 : index
    %101 = vector.load %arg9[%c0_40, %c0_41, %c0_42] : memref<9x8x8xbf16, #tpu.memory_space<vmem>>, vector<1x8x8xbf16>
    %102 = vector.shape_cast %101 : vector<1x8x8xbf16> to vector<8x8xbf16>
    %cst_43 = arith.constant dense<0.000000e+00> : vector<8x384xf32>
    %103 = tpu.matmul %102, %100, %cst_43 {dimension_numbers = #tpu.dot_dimension_numbers<[1], [0], [0], [1], [0, 0, 1, 1], [], []>} : vector<8x8xbf16>, vector<8x384xbf16>, vector<8x384xf32> -> vector<8x384xf32>
    %104 = vector.extract_strided_slice %96 {offsets = [0, 366], sizes = [8, 18], strides = [1, 1]} : vector<8x384xf32> to vector<8x18xf32>
    %105 = vector.extract_strided_slice %96 {offsets = [0, 0], sizes = [8, 366], strides = [1, 1]} : vector<8x384xf32> to vector<8x366xf32>
    %106 = tpu.concatenate %104, %105 in 1 : vector<8x18xf32>, vector<8x366xf32> -> vector<8x384xf32>
    %107 = arith.truncf %106 : vector<8x384xf32> to vector<8x384xbf16>
    %c1_44 = arith.constant 1 : index
    %c0_45 = arith.constant 0 : index
    %c0_46 = arith.constant 0 : index
    %108 = vector.load %arg9[%c1_44, %c0_45, %c0_46] : memref<9x8x8xbf16, #tpu.memory_space<vmem>>, vector<1x8x8xbf16>
    %109 = vector.shape_cast %108 : vector<1x8x8xbf16> to vector<8x8xbf16>
    %cst_47 = arith.constant dense<0.000000e+00> : vector<8x384xf32>
    %110 = tpu.matmul %109, %107, %cst_47 {dimension_numbers = #tpu.dot_dimension_numbers<[1], [0], [0], [1], [0, 0, 1, 1], [], []>} : vector<8x8xbf16>, vector<8x384xbf16>, vector<8x384xf32> -> vector<8x384xf32>
    %111 = arith.addf %103, %110 : vector<8x384xf32>
    %112 = vector.extract_strided_slice %96 {offsets = [0, 367], sizes = [8, 17], strides = [1, 1]} : vector<8x384xf32> to vector<8x17xf32>
    %113 = vector.extract_strided_slice %96 {offsets = [0, 0], sizes = [8, 367], strides = [1, 1]} : vector<8x384xf32> to vector<8x367xf32>
    %114 = tpu.concatenate %112, %113 in 1 : vector<8x17xf32>, vector<8x367xf32> -> vector<8x384xf32>
    %115 = arith.truncf %114 : vector<8x384xf32> to vector<8x384xbf16>
    %c2_48 = arith.constant 2 : index
    %c0_49 = arith.constant 0 : index
    %c0_50 = arith.constant 0 : index
    %116 = vector.load %arg9[%c2_48, %c0_49, %c0_50] : memref<9x8x8xbf16, #tpu.memory_space<vmem>>, vector<1x8x8xbf16>
    %117 = vector.shape_cast %116 : vector<1x8x8xbf16> to vector<8x8xbf16>
    %cst_51 = arith.constant dense<0.000000e+00> : vector<8x384xf32>
    %118 = tpu.matmul %117, %115, %cst_51 {dimension_numbers = #tpu.dot_dimension_numbers<[1], [0], [0], [1], [0, 0, 1, 1], [], []>} : vector<8x8xbf16>, vector<8x384xbf16>, vector<8x384xf32> -> vector<8x384xf32>
    %119 = arith.addf %111, %118 : vector<8x384xf32>
    %120 = vector.extract_strided_slice %96 {offsets = [0, 383], sizes = [8, 1], strides = [1, 1]} : vector<8x384xf32> to vector<8x1xf32>
    %121 = vector.extract_strided_slice %96 {offsets = [0, 0], sizes = [8, 383], strides = [1, 1]} : vector<8x384xf32> to vector<8x383xf32>
    %122 = tpu.concatenate %120, %121 in 1 : vector<8x1xf32>, vector<8x383xf32> -> vector<8x384xf32>
    %123 = arith.truncf %122 : vector<8x384xf32> to vector<8x384xbf16>
    %c3_52 = arith.constant 3 : index
    %c0_53 = arith.constant 0 : index
    %c0_54 = arith.constant 0 : index
    %124 = vector.load %arg9[%c3_52, %c0_53, %c0_54] : memref<9x8x8xbf16, #tpu.memory_space<vmem>>, vector<1x8x8xbf16>
    %125 = vector.shape_cast %124 : vector<1x8x8xbf16> to vector<8x8xbf16>
    %cst_55 = arith.constant dense<0.000000e+00> : vector<8x384xf32>
    %126 = tpu.matmul %125, %123, %cst_55 {dimension_numbers = #tpu.dot_dimension_numbers<[1], [0], [0], [1], [0, 0, 1, 1], [], []>} : vector<8x8xbf16>, vector<8x384xbf16>, vector<8x384xf32> -> vector<8x384xf32>
    %127 = arith.addf %119, %126 : vector<8x384xf32>
    %128 = arith.truncf %96 : vector<8x384xf32> to vector<8x384xbf16>
    %c4_56 = arith.constant 4 : index
    %c0_57 = arith.constant 0 : index
    %c0_58 = arith.constant 0 : index
    %129 = vector.load %arg9[%c4_56, %c0_57, %c0_58] : memref<9x8x8xbf16, #tpu.memory_space<vmem>>, vector<1x8x8xbf16>
    %130 = vector.shape_cast %129 : vector<1x8x8xbf16> to vector<8x8xbf16>
    %cst_59 = arith.constant dense<0.000000e+00> : vector<8x384xf32>
    %131 = tpu.matmul %130, %128, %cst_59 {dimension_numbers = #tpu.dot_dimension_numbers<[1], [0], [0], [1], [0, 0, 1, 1], [], []>} : vector<8x8xbf16>, vector<8x384xbf16>, vector<8x384xf32> -> vector<8x384xf32>
    %132 = arith.addf %127, %131 : vector<8x384xf32>
    %133 = vector.extract_strided_slice %96 {offsets = [0, 1], sizes = [8, 383], strides = [1, 1]} : vector<8x384xf32> to vector<8x383xf32>
    %134 = vector.extract_strided_slice %96 {offsets = [0, 0], sizes = [8, 1], strides = [1, 1]} : vector<8x384xf32> to vector<8x1xf32>
    %135 = tpu.concatenate %133, %134 in 1 : vector<8x383xf32>, vector<8x1xf32> -> vector<8x384xf32>
    %136 = arith.truncf %135 : vector<8x384xf32> to vector<8x384xbf16>
    %c5_60 = arith.constant 5 : index
    %c0_61 = arith.constant 0 : index
    %c0_62 = arith.constant 0 : index
    %137 = vector.load %arg9[%c5_60, %c0_61, %c0_62] : memref<9x8x8xbf16, #tpu.memory_space<vmem>>, vector<1x8x8xbf16>
    %138 = vector.shape_cast %137 : vector<1x8x8xbf16> to vector<8x8xbf16>
    %cst_63 = arith.constant dense<0.000000e+00> : vector<8x384xf32>
    %139 = tpu.matmul %138, %136, %cst_63 {dimension_numbers = #tpu.dot_dimension_numbers<[1], [0], [0], [1], [0, 0, 1, 1], [], []>} : vector<8x8xbf16>, vector<8x384xbf16>, vector<8x384xf32> -> vector<8x384xf32>
    %140 = arith.addf %132, %139 : vector<8x384xf32>
    %141 = vector.extract_strided_slice %96 {offsets = [0, 17], sizes = [8, 367], strides = [1, 1]} : vector<8x384xf32> to vector<8x367xf32>
    %142 = vector.extract_strided_slice %96 {offsets = [0, 0], sizes = [8, 17], strides = [1, 1]} : vector<8x384xf32> to vector<8x17xf32>
    %143 = tpu.concatenate %141, %142 in 1 : vector<8x367xf32>, vector<8x17xf32> -> vector<8x384xf32>
    %144 = arith.truncf %143 : vector<8x384xf32> to vector<8x384xbf16>
    %c6_64 = arith.constant 6 : index
    %c0_65 = arith.constant 0 : index
    %c0_66 = arith.constant 0 : index
    %145 = vector.load %arg9[%c6_64, %c0_65, %c0_66] : memref<9x8x8xbf16, #tpu.memory_space<vmem>>, vector<1x8x8xbf16>
    %146 = vector.shape_cast %145 : vector<1x8x8xbf16> to vector<8x8xbf16>
    %cst_67 = arith.constant dense<0.000000e+00> : vector<8x384xf32>
    %147 = tpu.matmul %146, %144, %cst_67 {dimension_numbers = #tpu.dot_dimension_numbers<[1], [0], [0], [1], [0, 0, 1, 1], [], []>} : vector<8x8xbf16>, vector<8x384xbf16>, vector<8x384xf32> -> vector<8x384xf32>
    %148 = arith.addf %140, %147 : vector<8x384xf32>
    %149 = vector.extract_strided_slice %96 {offsets = [0, 18], sizes = [8, 366], strides = [1, 1]} : vector<8x384xf32> to vector<8x366xf32>
    %150 = vector.extract_strided_slice %96 {offsets = [0, 0], sizes = [8, 18], strides = [1, 1]} : vector<8x384xf32> to vector<8x18xf32>
    %151 = tpu.concatenate %149, %150 in 1 : vector<8x366xf32>, vector<8x18xf32> -> vector<8x384xf32>
    %152 = arith.truncf %151 : vector<8x384xf32> to vector<8x384xbf16>
    %c7_68 = arith.constant 7 : index
    %c0_69 = arith.constant 0 : index
    %c0_70 = arith.constant 0 : index
    %153 = vector.load %arg9[%c7_68, %c0_69, %c0_70] : memref<9x8x8xbf16, #tpu.memory_space<vmem>>, vector<1x8x8xbf16>
    %154 = vector.shape_cast %153 : vector<1x8x8xbf16> to vector<8x8xbf16>
    %cst_71 = arith.constant dense<0.000000e+00> : vector<8x384xf32>
    %155 = tpu.matmul %154, %152, %cst_71 {dimension_numbers = #tpu.dot_dimension_numbers<[1], [0], [0], [1], [0, 0, 1, 1], [], []>} : vector<8x8xbf16>, vector<8x384xbf16>, vector<8x384xf32> -> vector<8x384xf32>
    %156 = arith.addf %148, %155 : vector<8x384xf32>
    %157 = vector.extract_strided_slice %96 {offsets = [0, 19], sizes = [8, 365], strides = [1, 1]} : vector<8x384xf32> to vector<8x365xf32>
    %158 = vector.extract_strided_slice %96 {offsets = [0, 0], sizes = [8, 19], strides = [1, 1]} : vector<8x384xf32> to vector<8x19xf32>
    %159 = tpu.concatenate %157, %158 in 1 : vector<8x365xf32>, vector<8x19xf32> -> vector<8x384xf32>
    %160 = arith.truncf %159 : vector<8x384xf32> to vector<8x384xbf16>
    %c8_72 = arith.constant 8 : index
    %c0_73 = arith.constant 0 : index
    %c0_74 = arith.constant 0 : index
    %161 = vector.load %arg9[%c8_72, %c0_73, %c0_74] : memref<9x8x8xbf16, #tpu.memory_space<vmem>>, vector<1x8x8xbf16>
    %162 = vector.shape_cast %161 : vector<1x8x8xbf16> to vector<8x8xbf16>
    %cst_75 = arith.constant dense<0.000000e+00> : vector<8x384xf32>
    %163 = tpu.matmul %162, %160, %cst_75 {dimension_numbers = #tpu.dot_dimension_numbers<[1], [0], [0], [1], [0, 0, 1, 1], [], []>} : vector<8x8xbf16>, vector<8x384xbf16>, vector<8x384xf32> -> vector<8x384xf32>
    %164 = arith.addf %156, %163 : vector<8x384xf32>
    %c0_76 = arith.constant 0 : index
    %c0_77 = arith.constant 0 : index
    %165 = vector.load %arg10[%c0_76, %c0_77] : memref<8x1xf32, #tpu.memory_space<vmem>>, vector<8x1xf32>
    %166 = vector.broadcast %165 : vector<8x1xf32> to vector<8x384xf32>
    %167 = arith.addf %164, %166 : vector<8x384xf32>
    %168 = arith.negf %167 : vector<8x384xf32>
    %169 = math.exp %168 : vector<8x384xf32>
    %cst_78 = arith.constant 1.000000e+00 : f32
    %170 = vector.broadcast %cst_78 : f32 to vector<8x384xf32>
    %171 = arith.addf %170, %169 : vector<8x384xf32>
    %172 = arith.divf %170, %171 : vector<8x384xf32>
    %173 = arith.mulf %167, %172 : vector<8x384xf32>
    %174 = vector.broadcast %2 : vector<1x384xf32> to vector<8x384xf32>
    %175 = arith.mulf %173, %174 : vector<8x384xf32>
    %c0_79 = arith.constant 0 : index
    %c0_80 = arith.constant 0 : index
    %c0_81 = arith.constant 0 : index
    %176 = vector.load %arg5[%c0_79, %c0_80, %c0_81] : memref<3x8x8xbf16, #tpu.memory_space<vmem>>, vector<1x8x8xbf16>
    %177 = vector.shape_cast %176 : vector<1x8x8xbf16> to vector<8x8xbf16>
    %178 = arith.truncf %16 : vector<8x384xf32> to vector<8x384xbf16>
    %cst_82 = arith.constant dense<0.000000e+00> : vector<8x384xf32>
    %179 = tpu.matmul %177, %178, %cst_82 {dimension_numbers = #tpu.dot_dimension_numbers<[1], [0], [0], [1], [0, 0, 1, 1], [], []>} : vector<8x8xbf16>, vector<8x384xbf16>, vector<8x384xf32> -> vector<8x384xf32>
    %c1_83 = arith.constant 1 : index
    %c0_84 = arith.constant 0 : index
    %c0_85 = arith.constant 0 : index
    %180 = vector.load %arg5[%c1_83, %c0_84, %c0_85] : memref<3x8x8xbf16, #tpu.memory_space<vmem>>, vector<1x8x8xbf16>
    %181 = vector.shape_cast %180 : vector<1x8x8xbf16> to vector<8x8xbf16>
    %182 = arith.truncf %17 : vector<8x384xf32> to vector<8x384xbf16>
    %cst_86 = arith.constant dense<0.000000e+00> : vector<8x384xf32>
    %183 = tpu.matmul %181, %182, %cst_86 {dimension_numbers = #tpu.dot_dimension_numbers<[1], [0], [0], [1], [0, 0, 1, 1], [], []>} : vector<8x8xbf16>, vector<8x384xbf16>, vector<8x384xf32> -> vector<8x384xf32>
    %184 = arith.addf %179, %183 : vector<8x384xf32>
    %c2_87 = arith.constant 2 : index
    %c0_88 = arith.constant 0 : index
    %c0_89 = arith.constant 0 : index
    %185 = vector.load %arg5[%c2_87, %c0_88, %c0_89] : memref<3x8x8xbf16, #tpu.memory_space<vmem>>, vector<1x8x8xbf16>
    %186 = vector.shape_cast %185 : vector<1x8x8xbf16> to vector<8x8xbf16>
    %187 = arith.truncf %175 : vector<8x384xf32> to vector<8x384xbf16>
    %cst_90 = arith.constant dense<0.000000e+00> : vector<8x384xf32>
    %188 = tpu.matmul %186, %187, %cst_90 {dimension_numbers = #tpu.dot_dimension_numbers<[1], [0], [0], [1], [0, 0, 1, 1], [], []>} : vector<8x8xbf16>, vector<8x384xbf16>, vector<8x384xf32> -> vector<8x384xf32>
    %189 = arith.addf %184, %188 : vector<8x384xf32>
    %c0_91 = arith.constant 0 : index
    %c0_92 = arith.constant 0 : index
    %190 = vector.load %arg6[%c0_91, %c0_92] : memref<8x1xf32, #tpu.memory_space<vmem>>, vector<8x1xf32>
    %191 = vector.broadcast %190 : vector<8x1xf32> to vector<8x384xf32>
    %192 = arith.addf %189, %191 : vector<8x384xf32>
    %193 = arith.negf %192 : vector<8x384xf32>
    %194 = math.exp %193 : vector<8x384xf32>
    %cst_93 = arith.constant 1.000000e+00 : f32
    %195 = vector.broadcast %cst_93 : f32 to vector<8x384xf32>
    %196 = arith.addf %195, %194 : vector<8x384xf32>
    %197 = arith.divf %195, %196 : vector<8x384xf32>
    %198 = arith.mulf %192, %197 : vector<8x384xf32>
    %199 = arith.truncf %198 : vector<8x384xf32> to vector<8x384xbf16>
    %c0_94 = arith.constant 0 : index
    %c0_95 = arith.constant 0 : index
    %c0_96 = arith.constant 0 : index
    %200 = vector.load %arg11[%c0_94, %c0_95, %c0_96] : memref<1x8x384xbf16, #tpu.memory_space<vmem>>, vector<1x8x384xbf16>
    %201 = vector.shape_cast %200 : vector<1x8x384xbf16> to vector<8x384xbf16>
    %202 = vector.shape_cast %199 : vector<8x384xbf16> to vector<1x8x384xbf16>
    tpu.vector_store %arg11[%c0_94, %c0_95, %c0_96], %202 {strides = array<i32>} : memref<1x8x384xbf16, #tpu.memory_space<vmem>>, vector<1x8x384xbf16>,
    return
  }
  func.func @transform_0(%arg0: i32) -> (i32, i32, i32) {
    %c0_i32 = arith.constant 0 : i32
    %c0_i32_0 = arith.constant 0 : i32
    %c0_i32_1 = arith.constant 0 : i32
    return %arg0, %c0_i32, %c0_i32_0 : i32, i32, i32
  }
  func.func @transform_1(%arg0: i32) -> (i32, i32) {
    %c0_i32 = arith.constant 0 : i32
    %c0_i32_0 = arith.constant 0 : i32
    %c0_i32_1 = arith.constant 0 : i32
    return %c0_i32, %c0_i32_0 : i32, i32
  }
  func.func @transform_2(%arg0: i32) -> (i32, i32) {
    %c0_i32 = arith.constant 0 : i32
    %c0_i32_0 = arith.constant 0 : i32
    %c0_i32_1 = arith.constant 0 : i32
    return %c0_i32, %c0_i32_0 : i32, i32
  }
  func.func @transform_3(%arg0: i32) -> (i32, i32) {
    %c0_i32 = arith.constant 0 : i32
    %c0_i32_0 = arith.constant 0 : i32
    %c0_i32_1 = arith.constant 0 : i32
    return %c0_i32, %c0_i32_0 : i32, i32
  }
  func.func @transform_4(%arg0: i32) -> (i32, i32, i32) {
    %c0_i32 = arith.constant 0 : i32
    %c0_i32_0 = arith.constant 0 : i32
    %c0_i32_1 = arith.constant 0 : i32
    %c0_i32_2 = arith.constant 0 : i32
    return %c0_i32, %c0_i32_0, %c0_i32_1 : i32, i32, i32
  }
  func.func @transform_5(%arg0: i32) -> (i32, i32) {
    %c0_i32 = arith.constant 0 : i32
    %c0_i32_0 = arith.constant 0 : i32
    %c0_i32_1 = arith.constant 0 : i32
    return %c0_i32, %c0_i32_0 : i32, i32
  }
  func.func @transform_6(%arg0: i32) -> (i32, i32, i32) {
    %c0_i32 = arith.constant 0 : i32
    %c0_i32_0 = arith.constant 0 : i32
    %c0_i32_1 = arith.constant 0 : i32
    %c0_i32_2 = arith.constant 0 : i32
    return %c0_i32, %c0_i32_0, %c0_i32_1 : i32, i32, i32
  }
  func.func @transform_7(%arg0: i32) -> (i32, i32) {
    %c0_i32 = arith.constant 0 : i32
    %c0_i32_0 = arith.constant 0 : i32
    %c0_i32_1 = arith.constant 0 : i32
    return %c0_i32, %c0_i32_0 : i32, i32
  }
  func.func @transform_8(%arg0: i32) -> (i32, i32, i32) {
    %c0_i32 = arith.constant 0 : i32
    %c0_i32_0 = arith.constant 0 : i32
    %c0_i32_1 = arith.constant 0 : i32
    %c0_i32_2 = arith.constant 0 : i32
    return %c0_i32, %c0_i32_0, %c0_i32_1 : i32, i32, i32
  }
  func.func @transform_9(%arg0: i32) -> (i32, i32) {
    %c0_i32 = arith.constant 0 : i32
    %c0_i32_0 = arith.constant 0 : i32
    %c0_i32_1 = arith.constant 0 : i32
    return %c0_i32, %c0_i32_0 : i32, i32
  }
  func.func @transform_10(%arg0: i32) -> (i32, i32, i32) {
    %c0_i32 = arith.constant 0 : i32
    %c0_i32_0 = arith.constant 0 : i32
    %c0_i32_1 = arith.constant 0 : i32
    return %arg0, %c0_i32, %c0_i32_0 : i32, i32, i32
  }
}

</mosaic_0001>

<llo_original>
// kernel: tpu_custom_call.1
$region0: #{tpu_custom_call.1}
  #allocation0 [shape = 'u32[]', space=smem, size = 0x4, offset = 0x4, fixed_abs, tag = 'smem constant byte address 0x4 - core index']
  #allocation1 [shape = 'u32[72,128]{1,0:T(1,128)}', space=vmem, size = 0x9000, scoped, tag = 'internal scratch']
  %s0 = inlined_call_operand.hbm [shape: f32[8,384], index: 0, kind: input, shape index: {}]
  %s1 = inlined_call_operand.hbm [shape: f32[8,384], index: 1, kind: output, shape index: {}]
  %s2 = sld [smem:[#allocation0]]
  $region18: #{tpu_custom_call.1} parent=0
    _
  %s4 = ssub.s32 1, %s2
  %s5 = scalar_select 0, %s4, %s2
  $region1: #{tpu_custom_call.1} parent=0
    #allocation2 [shape = 'u8[12288]{0}', space=vmem, size = 0x3000, scoped, tag = 'input window, operand 0, single buffered']
    #allocation3 [shape = 's32[1]{0}', space=sflag, size = 0x4, scoped, tag = 'scoped memory for tpu_custom_call.1']
    #allocation4 [shape = 's32[1]{0}', space=sflag, size = 0x4, scoped, tag = 'scoped memory for tpu_custom_call.1']
    #allocation5 [shape = 'u8[12288]{0}', space=vmem, size = 0x3000, scoped, tag = 'output window, operand 0, single buffered']
    %6 = vsyncpa [#allocation3], 0
    %7 = vsyncpa [#allocation4], 0
    // Predicated region
    $region2: #{tpu_custom_call.1} parent=1 // pred_check
      _
    $region3: #{tpu_custom_call.1} parent=1 // pred_check_branch
      %9 = sbr.rel (0) target = $region5
    $region4: #{tpu_custom_call.1} parent=1 // pred_region
      %11 = vsyncadd [#allocation3], 0
      %s13 = sshll.u32 %s0, 4
      %s14 = int_to_ptr.hbm [resolvable:$true] %s13
      %s15 = sshll.u32 [#allocation2], 4
      %s16 = int_to_ptr.vmem [resolvable:$true] %s15
      %18 = dma.hbm_to_vmem [thread:$0]  %s14, 384, %s16, [#allocation3]
    $region5: #{tpu_custom_call.1} parent=1 // pred_fallthru
      _
    // Predicated region
    $region6: #{tpu_custom_call.1} parent=1 // pred_check
      _
    $region7: #{tpu_custom_call.1} parent=1 // pred_check_branch
      %20 = sbr.rel (0) target = $region9
    $region8: #{tpu_custom_call.1} parent=1 // pred_region
      %22 = dma.done [#allocation3], 384
    $region9: #{tpu_custom_call.1} parent=1 // pred_fallthru
      _
    %v23 = vld [vmem:[#allocation2] sm:$0xff]
    %v24 = vld [vmem:[#allocation2 + $0x8] sm:$0xff]
    %v25 = vld [vmem:[#allocation2 + $0x10] sm:$0xff]
    %26 = vrot.lane.b32.xlu0 %v23, 109
    %v27 = vpop.permute.xlu0 %26
    %28 = vrot.lane.b32.xlu0 %v24, 109
    %v29 = vpop.permute.xlu0 %28
    %30 = vrot.lane.b32.xlu0 %v25, 109
    %v31 = vpop.permute.xlu0 %30
    %v32 = vlaneseq
    %v33 = vand.u32 %v32, 127
    %vm34 = vcmp.lt.s32.totalorder %v33, 109
    %v35 = vsel %vm34, %v29, %v31
    %v36 = vsel %vm34, %v27, %v29
    %v37 = vsel %vm34, %v31, %v27
    %38 = vrot.lane.b32.xlu0 %v36, 1
    %v39 = vpop.permute.xlu0 %38
    %40 = vrot.lane.b32.xlu0 %v35, 1
    %v41 = vpop.permute.xlu0 %40
    %42 = vrot.lane.b32.xlu0 %v37, 1
    %v43 = vpop.permute.xlu0 %42
    %vm44 = vcmp.lt.s32.totalorder %v33, 1
    %v45 = vsel %vm44, %v41, %v43
    %v46 = vsel %vm44, %v39, %v41
    %v47 = vsel %vm44, %v43, %v39
    %48 = vst [vmem:[#allocation5] sm:$0xff] %v47
    %49 = vst [vmem:[#allocation5 + $0x8] sm:$0xff] %v46
    %50 = vst [vmem:[#allocation5 + $0x10] sm:$0xff] %v45
    // Predicated region
    $region10: #{tpu_custom_call.1} parent=1 // pred_check
      _
    $region11: #{tpu_custom_call.1} parent=1 // pred_check_branch
      %52 = sbr.rel (0) target = $region13
    $region12: #{tpu_custom_call.1} parent=1 // pred_region
      %54 = vsyncadd [#allocation4], 0
      %s56 = sshll.u32 [#allocation5], 4
      %s57 = int_to_ptr.vmem [resolvable:$true] %s56
      %s58 = sshll.u32 %s1, 4
      %s59 = int_to_ptr.hbm [resolvable:$true] %s58
      %61 = dma.vmem_to_hbm [thread:$0]  %s57, 384, %s59, [#allocation4]
    $region13: #{tpu_custom_call.1} parent=1 // pred_fallthru
      _
    // Predicated region
    $region14: #{tpu_custom_call.1} parent=1 // pred_check
      _
    $region15: #{tpu_custom_call.1} parent=1 // pred_check_branch
      %63 = sbr.rel (0) target = $region17
    $region16: #{tpu_custom_call.1} parent=1 // pred_region
      %65 = dma.done [#allocation4], 384
    $region17: #{tpu_custom_call.1} parent=1 // pred_fallthru
      _
    %66 = vsyncpa [#allocation3], 1
    %67 = vsyncpa [#allocation4], 1

// kernel: c2f_forward.1
$region0: #{c2f_forward.1}
  #allocation0 [shape = 'u32[]', space=smem, size = 0x4, offset = 0x4, fixed_abs, tag = 'smem constant byte address 0x4 - core index']
  #allocation1 [shape = 'u32[72,128]{1,0:T(1,128)}', space=vmem, size = 0x9000, scoped, tag = 'internal scratch']
  %s0 = inlined_call_operand.vmem [shape: bf16[2,8,384], index: 0, kind: input, shape index: {}]
  %s1 = inlined_call_operand.vmem [shape: f32[1,384], index: 1, kind: input, shape index: {}]
  %s2 = inlined_call_operand.vmem [shape: bf16[16,8], index: 2, kind: input, shape index: {}]
  %s3 = inlined_call_operand.vmem [shape: f32[16,1], index: 3, kind: input, shape index: {}]
  %s4 = inlined_call_operand.vmem [shape: bf16[3,8,8], index: 4, kind: input, shape index: {}]
  %s5 = inlined_call_operand.vmem [shape: f32[8,1], index: 5, kind: input, shape index: {}]
  %s6 = inlined_call_operand.vmem [shape: bf16[9,8,8], index: 6, kind: input, shape index: {}]
  %s7 = inlined_call_operand.vmem [shape: f32[8,1], index: 7, kind: input, shape index: {}]
  %s8 = inlined_call_operand.vmem [shape: bf16[9,8,8], index: 8, kind: input, shape index: {}]
  %s9 = inlined_call_operand.vmem [shape: f32[8,1], index: 9, kind: input, shape index: {}]
  %s10 = inlined_call_operand.vmem [shape: bf16[2,8,384], index: 10, kind: output, shape index: {}]
  %s11 = sld [smem:[#allocation0]]
  $region73: #{c2f_forward.1} parent=0
    _
  %s13 = ssub.s32 1, %s11
  %s14 = scalar_select 0, %s13, %s11
  loop: start=0, step=1, limit=4
  $region2: #{c2f_forward.1} parent=0 // loop_pre_header
    _
  $region3: #{c2f_forward.1} parent=0 // loop_header
    %s16 = sphi 0, %s20
    %p17 = scmp.ge.s32.totalorder %s16, 4
    %s26 = sphi 0, %s28
    %s29 = sphi 0, %s26
    %s30 = sphi 0, %s29
    %s46 = sphi 0, %s30
    %s50 = sphi 0, %s50
    %s52 = sphi 0, %s50
    %s53 = sphi 0, %s52
    %s67 = sphi 0, %s53
    %s71 = sphi 0, %s71
    %s73 = sphi 0, %s71
    %s74 = sphi 0, %s73
    %s88 = sphi 0, %s74
    %s92 = sphi 0, %s92
    %s94 = sphi 0, %s92
    %s95 = sphi 0, %s94
    %s109 = sphi 0, %s95
    %s113 = sphi 0, %s113
    %s115 = sphi 0, %s113
    %s116 = sphi 0, %s115
    %s130 = sphi 0, %s116
    %s134 = sphi 0, %s134
    %s136 = sphi 0, %s134
    %s137 = sphi 0, %s136
    %s151 = sphi 0, %s137
    %s155 = sphi 0, %s155
    %s157 = sphi 0, %s155
    %s158 = sphi 0, %s157
    %s172 = sphi 0, %s158
    %s176 = sphi 0, %s176
    %s178 = sphi 0, %s176
    %s179 = sphi 0, %s178
    %s193 = sphi 0, %s179
    %s197 = sphi 0, %s197
    %s199 = sphi 0, %s197
    %s200 = sphi 0, %s199
    %s214 = sphi 0, %s200
    %s218 = sphi 0, %s218
    %s220 = sphi 0, %s218
    %s221 = sphi 0, %s220
    %s235 = sphi 0, %s221
    %s241 = sphi 0, %s243
    %s244 = sphi 0, %s241
    %s245 = sphi 0, %s244
    %s261 = sphi 0, %s245
  $region4: #{c2f_forward.1} parent=0 // loop_header_branch
    %19 = sbr.rel (%p17) target = $region8
  $region5: #{c2f_forward.1} parent=0 // loop_body
    %s21 = ssub.s32 %s16, 1
    %s22 = ssub.s32 %s16, 2
    %s23 = sadd.s32 %s16, 1
    %s24 = ssub.s32 %s16, %s23
    %p25 = scmp.eq.s32.totalorder %s24, 0
    %s27 = sadd.s32 %s26, 1
    %s28 = scalar_select %p25, %s26, %s27
    %p31 = pneg %p25
    %p32 = scmp.eq.s32.totalorder %s16, 1
    %p33 = por %p31, %p32
    %p34 = scmp.ne.s32.totalorder %s26, %s29
    %p35 = scmp.eq.s32.totalorder %s16, 0
    %p36 = por %p34, %p35
    %p37 = scmp.ne.s32.totalorder %s26, %s29
    %p38 = scmp.eq.s32.totalorder %s21, 1
    %p39 = por %p37, %p38
    %p40 = scmp.ne.s32.totalorder %s29, %s30
    %p41 = scmp.eq.s32.totalorder %s21, 0
    %p42 = por %p40, %p41
    %p43 = scmp.ne.s32.totalorder %s29, %s30
    %p44 = scmp.eq.s32.totalorder %s22, 1
    %p45 = por %p43, %p44
    %p47 = scmp.ne.s32.totalorder %s30, %s46
    %p48 = scmp.eq.s32.totalorder %s22, 0
    %p49 = por %p47, %p48
    %s51 = sadd.s32 %s50, 1
    %p54 = scmp.eq.s32.totalorder %s16, 1
    %p55 = scmp.ne.s32.totalorder %s50, %s52
    %p56 = scmp.eq.s32.totalorder %s16, 0
    %p57 = por %p55, %p56
    %p58 = scmp.ne.s32.totalorder %s50, %s52
    %p59 = scmp.eq.s32.totalorder %s21, 1
    %p60 = por %p58, %p59
    %p61 = scmp.ne.s32.totalorder %s52, %s53
    %p62 = scmp.eq.s32.totalorder %s21, 0
    %p63 = por %p61, %p62
    %p64 = scmp.ne.s32.totalorder %s52, %s53
    %p65 = scmp.eq.s32.totalorder %s22, 1
    %p66 = por %p64, %p65
    %p68 = scmp.ne.s32.totalorder %s53, %s67
    %p69 = scmp.eq.s32.totalorder %s22, 0
    %p70 = por %p68, %p69
    %s72 = sadd.s32 %s71, 1
    %p75 = scmp.eq.s32.totalorder %s16, 1
    %p76 = scmp.ne.s32.totalorder %s71, %s73
    %p77 = scmp.eq.s32.totalorder %s16, 0
    %p78 = por %p76, %p77
    %p79 = scmp.ne.s32.totalorder %s71, %s73
    %p80 = scmp.eq.s32.totalorder %s21, 1
    %p81 = por %p79, %p80
    %p82 = scmp.ne.s32.totalorder %s73, %s74
    %p83 = scmp.eq.s32.totalorder %s21, 0
    %p84 = por %p82, %p83
    %p85 = scmp.ne.s32.totalorder %s73, %s74
    %p86 = scmp.eq.s32.totalorder %s22, 1
    %p87 = por %p85, %p86
    %p89 = scmp.ne.s32.totalorder %s74, %s88
    %p90 = scmp.eq.s32.totalorder %s22, 0
    %p91 = por %p89, %p90
    %s93 = sadd.s32 %s92, 1
    %p96 = scmp.eq.s32.totalorder %s16, 1
    %p97 = scmp.ne.s32.totalorder %s92, %s94
    %p98 = scmp.eq.s32.totalorder %s16, 0
    %p99 = por %p97, %p98
    %p100 = scmp.ne.s32.totalorder %s92, %s94
    %p101 = scmp.eq.s32.totalorder %s21, 1
    %p102 = por %p100, %p101
    %p103 = scmp.ne.s32.totalorder %s94, %s95
    %p104 = scmp.eq.s32.totalorder %s21, 0
    %p105 = por %p103, %p104
    %p106 = scmp.ne.s32.totalorder %s94, %s95
    %p107 = scmp.eq.s32.totalorder %s22, 1
    %p108 = por %p106, %p107
    %p110 = scmp.ne.s32.totalorder %s95, %s109
    %p111 = scmp.eq.s32.totalorder %s22, 0
    %p112 = por %p110, %p111
    %s114 = sadd.s32 %s113, 1
    %p117 = scmp.eq.s32.totalorder %s16, 1
    %p118 = scmp.ne.s32.totalorder %s113, %s115
    %p119 = scmp.eq.s32.totalorder %s16, 0
    %p120 = por %p118, %p119
    %p121 = scmp.ne.s32.totalorder %s113, %s115
    %p122 = scmp.eq.s32.totalorder %s21, 1
    %p123 = por %p121, %p122
    %p124 = scmp.ne.s32.totalorder %s115, %s116
    %p125 = scmp.eq.s32.totalorder %s21, 0
    %p126 = por %p124, %p125
    %p127 = scmp.ne.s32.totalorder %s115, %s116
    %p128 = scmp.eq.s32.totalorder %s22, 1
    %p129 = por %p127, %p128
    %p131 = scmp.ne.s32.totalorder %s116, %s130
    %p132 = scmp.eq.s32.totalorder %s22, 0
    %p133 = por %p131, %p132
    %s135 = sadd.s32 %s134, 1
    %p138 = scmp.eq.s32.totalorder %s16, 1
    %p139 = scmp.ne.s32.totalorder %s134, %s136
    %p140 = scmp.eq.s32.totalorder %s16, 0
    %p141 = por %p139, %p140
    %p142 = scmp.ne.s32.totalorder %s134, %s136
    %p143 = scmp.eq.s32.totalorder %s21, 1
    %p144 = por %p142, %p143
    %p145 = scmp.ne.s32.totalorder %s136, %s137
    %p146 = scmp.eq.s32.totalorder %s21, 0
    %p147 = por %p145, %p146
    %p148 = scmp.ne.s32.totalorder %s136, %s137
    %p149 = scmp.eq.s32.totalorder %s22, 1
    %p150 = por %p148, %p149
    %p152 = scmp.ne.s32.totalorder %s137, %s151
    %p153 = scmp.eq.s32.totalorder %s22, 0
    %p154 = por %p152, %p153
    %s156 = sadd.s32 %s155, 1
    %p159 = scmp.eq.s32.totalorder %s16, 1
    %p160 = scmp.ne.s32.totalorder %s155, %s157
    %p161 = scmp.eq.s32.totalorder %s16, 0
    %p162 = por %p160, %p161
    %p163 = scmp.ne.s32.totalorder %s155, %s157
    %p164 = scmp.eq.s32.totalorder %s21, 1
    %p165 = por %p163, %p164
    %p166 = scmp.ne.s32.totalorder %s157, %s158
    %p167 = scmp.eq.s32.totalorder %s21, 0
    %p168 = por %p166, %p167
    %p169 = scmp.ne.s32.totalorder %s157, %s158
    %p170 = scmp.eq.s32.totalorder %s22, 1
    %p171 = por %p169, %p170
    %p173 = scmp.ne.s32.totalorder %s158, %s172
    %p174 = scmp.eq.s32.totalorder %s22, 0
    %p175 = por %p173, %p174
    %s177 = sadd.s32 %s176, 1
    %p180 = scmp.eq.s32.totalorder %s16, 1
    %p181 = scmp.ne.s32.totalorder %s176, %s178
    %p182 = scmp.eq.s32.totalorder %s16, 0
    %p183 = por %p181, %p182
    %p184 = scmp.ne.s32.totalorder %s176, %s178
    %p185 = scmp.eq.s32.totalorder %s21, 1
    %p186 = por %p184, %p185
    %p187 = scmp.ne.s32.totalorder %s178, %s179
    %p188 = scmp.eq.s32.totalorder %s21, 0
    %p189 = por %p187, %p188
    %p190 = scmp.ne.s32.totalorder %s178, %s179
    %p191 = scmp.eq.s32.totalorder %s22, 1
    %p192 = por %p190, %p191
    %p194 = scmp.ne.s32.totalorder %s179, %s193
    %p195 = scmp.eq.s32.totalorder %s22, 0
    %p196 = por %p194, %p195
    %s198 = sadd.s32 %s197, 1
    %p201 = scmp.eq.s32.totalorder %s16, 1
    %p202 = scmp.ne.s32.totalorder %s197, %s199
    %p203 = scmp.eq.s32.totalorder %s16, 0
    %p204 = por %p202, %p203
    %p205 = scmp.ne.s32.totalorder %s197, %s199
    %p206 = scmp.eq.s32.totalorder %s21, 1
    %p207 = por %p205, %p206
    %p208 = scmp.ne.s32.totalorder %s199, %s200
    %p209 = scmp.eq.s32.totalorder %s21, 0
    %p210 = por %p208, %p209
    %p211 = scmp.ne.s32.totalorder %s199, %s200
    %p212 = scmp.eq.s32.totalorder %s22, 1
    %p213 = por %p211, %p212
    %p215 = scmp.ne.s32.totalorder %s200, %s214
    %p216 = scmp.eq.s32.totalorder %s22, 0
    %p217 = por %p215, %p216
    %s219 = sadd.s32 %s218, 1
    %p222 = scmp.eq.s32.totalorder %s16, 1
    %p223 = scmp.ne.s32.totalorder %s218, %s220
    %p224 = scmp.eq.s32.totalorder %s16, 0
    %p225 = por %p223, %p224
    %p226 = scmp.ne.s32.totalorder %s218, %s220
    %p227 = scmp.eq.s32.totalorder %s21, 1
    %p228 = por %p226, %p227
    %p229 = scmp.ne.s32.totalorder %s220, %s221
    %p230 = scmp.eq.s32.totalorder %s21, 0
    %p231 = por %p229, %p230
    %p232 = scmp.ne.s32.totalorder %s220, %s221
    %p233 = scmp.eq.s32.totalorder %s22, 1
    %p234 = por %p232, %p233
    %p236 = scmp.ne.s32.totalorder %s221, %s235
    %p237 = scmp.eq.s32.totalorder %s22, 0
    %p238 = por %p236, %p237
    %s239 = ssub.s32 %s16, %s23
    %p240 = scmp.eq.s32.totalorder %s239, 0
    %s242 = sadd.s32 %s241, 1
    %s243 = scalar_select %p240, %s241, %s242
    %p246 = pneg %p240
    %p247 = scmp.eq.s32.totalorder %s16, 1
    %p248 = por %p246, %p247
    %p249 = scmp.ne.s32.totalorder %s241, %s244
    %p250 = scmp.eq.s32.totalorder %s16, 0
    %p251 = por %p249, %p250
    %p252 = scmp.ne.s32.totalorder %s241, %s244
    %p253 = scmp.eq.s32.totalorder %s21, 1
    %p254 = por %p252, %p253
    %p255 = scmp.ne.s32.totalorder %s244, %s245
    %p256 = scmp.eq.s32.totalorder %s21, 0
    %p257 = por %p255, %p256
    %p258 = scmp.ne.s32.totalorder %s244, %s245
    %p259 = scmp.eq.s32.totalorder %s22, 1
    %p260 = por %p258, %p259
    %p262 = scmp.ne.s32.totalorder %s245, %s261
    %p263 = scmp.eq.s32.totalorder %s22, 0
    %p264 = por %p262, %p263
    %p265 = scmp.le.s32.totalorder 1, %s16
    %p266 = scmp.lt.s32.totalorder %s16, 3
    %p267 = pnand %p265, %p266
    %p268 = pneg %p267
    // Predicated region
    $region9: #{c2f_forward.1} parent=5 // pred_check
      _
    $region10: #{c2f_forward.1} parent=5 // pred_check_branch
      %270 = sbr.rel (%p267) target = $region12
    $region11: #{c2f_forward.1} parent=5 // pred_region
      %s271 = ssub.s32 %s16, 1
      // Predicated region
      $region13: #{c2f_forward.1} parent=11 // pred_check
        %p272 = pneg %p63
      $region14: #{c2f_forward.1} parent=11 // pred_check_branch
        %274 = sbr.rel (%p272) target = $region16
      $region15: #{c2f_forward.1} parent=11 // pred_region
        _
      $region16: #{c2f_forward.1} parent=11 // pred_fallthru
        _
      // Predicated region
      $region17: #{c2f_forward.1} parent=11 // pred_check
        %p275 = pneg %p84
      $region18: #{c2f_forward.1} parent=11 // pred_check_branch
        %277 = sbr.rel (%p275) target = $region20
      $region19: #{c2f_forward.1} parent=11 // pred_region
        _
      $region20: #{c2f_forward.1} parent=11 // pred_fallthru
        _
      // Predicated region
      $region21: #{c2f_forward.1} parent=11 // pred_check
        %p278 = pneg %p105
      $region22: #{c2f_forward.1} parent=11 // pred_check_branch
        %280 = sbr.rel (%p278) target = $region24
      $region23: #{c2f_forward.1} parent=11 // pred_region
        _
      $region24: #{c2f_forward.1} parent=11 // pred_fallthru
        _
      // Predicated region
      $region25: #{c2f_forward.1} parent=11 // pred_check
        %p281 = pneg %p126
      $region26: #{c2f_forward.1} parent=11 // pred_check_branch
        %283 = sbr.rel (%p281) target = $region28
      $region27: #{c2f_forward.1} parent=11 // pred_region
        _
      $region28: #{c2f_forward.1} parent=11 // pred_fallthru
        _
      // Predicated region
      $region29: #{c2f_forward.1} parent=11 // pred_check
        %p284 = pneg %p147
      $region30: #{c2f_forward.1} parent=11 // pred_check_branch
        %286 = sbr.rel (%p284) target = $region32
      $region31: #{c2f_forward.1} parent=11 // pred_region
        _
      $region32: #{c2f_forward.1} parent=11 // pred_fallthru
        _
      // Predicated region
      $region33: #{c2f_forward.1} parent=11 // pred_check
        %p287 = pneg %p168
      $region34: #{c2f_forward.1} parent=11 // pred_check_branch
        %289 = sbr.rel (%p287) target = $region36
      $region35: #{c2f_forward.1} parent=11 // pred_region
        _
      $region36: #{c2f_forward.1} parent=11 // pred_fallthru
        _
      // Predicated region
      $region37: #{c2f_forward.1} parent=11 // pred_check
        %p290 = pneg %p189
      $region38: #{c2f_forward.1} parent=11 // pred_check_branch
        %292 = sbr.rel (%p290) target = $region40
      $region39: #{c2f_forward.1} parent=11 // pred_region
        _
      $region40: #{c2f_forward.1} parent=11 // pred_fallthru
        _
      // Predicated region
      $region41: #{c2f_forward.1} parent=11 // pred_check
        %p293 = pneg %p210
      $region42: #{c2f_forward.1} parent=11 // pred_check_branch
        %295 = sbr.rel (%p293) target = $region44
      $region43: #{c2f_forward.1} parent=11 // pred_region
        _
      $region44: #{c2f_forward.1} parent=11 // pred_fallthru
        _
      // Predicated region
      $region45: #{c2f_forward.1} parent=11 // pred_check
        %p296 = pneg %p231
      $region46: #{c2f_forward.1} parent=11 // pred_check_branch
        %298 = sbr.rel (%p296) target = $region48
      $region47: #{c2f_forward.1} parent=11 // pred_region
        _
      $region48: #{c2f_forward.1} parent=11 // pred_fallthru
        _
    $region12: #{c2f_forward.1} parent=5 // pred_fallthru
      _
    %p299 = scmp.lt.s32.totalorder %s16, 2
    // Predicated region
    $region49: #{c2f_forward.1} parent=5 // pred_check
      %p300 = pneg %p299
    $region50: #{c2f_forward.1} parent=5 // pred_check_branch
      %302 = sbr.rel (%p300) target = $region52
    $region51: #{c2f_forward.1} parent=5 // pred_region
      // Predicated region
      $region53: #{c2f_forward.1} parent=51 // pred_check
        %p303 = pneg %p36
      $region54: #{c2f_forward.1} parent=51 // pred_check_branch
        %305 = sbr.rel (%p303) target = $region56
      $region55: #{c2f_forward.1} parent=51 // pred_region
        %p306 = scmp.lt.s32.totalorder %s16, 1
        %s307 = scalar_select %p306, %s16, 1
        %s308 = smul.addr %s307, 3
        %s309 = smul.addr %s308, 4
        %s310 = scalar_lea.vmem %s0, %s309
      $region56: #{c2f_forward.1} parent=51 // pred_fallthru
        _
    $region52: #{c2f_forward.1} parent=5 // pred_fallthru
      _
    %p311 = scmp.le.s32.totalorder 1, %s16
    %p312 = scmp.lt.s32.totalorder %s16, 3
    %p313 = pnand %p311, %p312
    %p314 = pneg %p313
    // Predicated region
    $region57: #{c2f_forward.1} parent=5 // pred_check
      _
    $region58: #{c2f_forward.1} parent=5 // pred_check_branch
      %316 = sbr.rel (%p313) target = $region60
    $region59: #{c2f_forward.1} parent=5 // pred_region
      %s317 = ssub.s32 %s16, 1
      %p318 = scmp.lt.s32.totalorder %s21, 1
      %s319 = scalar_select %p318, %s21, 1
      %s320 = smul.addr %s319, 3
      %s321 = smul.addr %s320, 4
      %s322 = scalar_lea.vmem %s0, %s321
      %p323 = pneg %p42
      %p324 = pneg %p39
      %p325 = pneg %p63
      %p326 = pneg %p60
      %p327 = pneg %p84
      %p328 = pneg %p81
      %p329 = pneg %p105
      %p330 = pneg %p102
      %p331 = pneg %p126
      %p332 = pneg %p123
      %p333 = pneg %p147
      %p334 = pneg %p144
      %p335 = pneg %p168
      %p336 = pneg %p165
      %p337 = pneg %p189
      %p338 = pneg %p186
      %p339 = pneg %p210
      %p340 = pneg %p207
      %p341 = pneg %p231
      %p342 = pneg %p228
      %p343 = pneg %p257
      %p344 = pneg %p254
      %p345 = scmp.lt.s32.totalorder %s21, 1
      %s346 = scalar_select %p345, %s21, 1
      %s347 = smul.addr %s346, 3
      %s348 = smul.addr %s347, 4
      %s349 = scalar_lea.vmem %s10, %s348
      %p350 = scmp.lt.s32.totalorder %s21, 1
      %s351 = scalar_select %p350, %s21, 1
      %s352 = smul.addr %s351, 3
      %s353 = smul.addr %s352, 4
      %s354 = scalar_lea.vmem %s0, %s353
      %p355 = scmp.lt.s32.totalorder %s21, 1
      %s356 = scalar_select %p355, %s21, 1
      %s357 = smul.addr %s356, 3
      %s358 = smul.addr %s357, 4
      %s359 = scalar_lea.vmem %s10, %s358
      %v361 = vld [vmem:[%s354] sm:$0xff]
      %v362 = vld [vmem:[%s354 + $0x8] sm:$0xf]
      %v363 = vld [vmem:[%s1] sm:$0x7]
      %v364 = vld [vmem:[%s2] sm:$0xf]
      %v365 = vld [vmem:[%s2 + $0x4] sm:$0xf]
      %v366 = vld [vmem:[%s3] sm:$0xff]
      %v367 = vld [vmem:[%s3 + $0x8] sm:$0xff]
      %369 = vset.pattern.permute.xlu0 0
      %370 = vperm.xlu0 %369, %v366
      %v371 = vpop.permute.xlu0 %370
      %374 = vset.pattern.permute.xlu0 0
      %375 = vperm.xlu0 %374, %v367
      %v376 = vpop.permute.xlu0 %375
      %v380 = vunpack.c.l.b16 %v364
      %v381 = vunpack.c.l.b16 %v365
      %v382 = vpack.c.b16 %v381, %v380
      %v385 = vunpack.c.l.b16 %v361
      %v386 = vunpack.c.h.b16 %v361
      %v387 = vunpack.c.l.b16 %v362
      %v388 = vpack.c.b16 %v385, %v385
      %v389 = vpack.c.b16 %v386, %v386
      %v390 = vpack.c.b16 %v387, %v387
      %vm391 = vcmask 64512
      %v393 = vsel %vm391, %v382, 0
      %vm395 = vcmask 1043456
      %v397 = vsel %vm395, %v388, 0
      %v400 = vsel %vm395, %v389, 0
      %v403 = vsel %vm395, %v390, 0
      %405 = vmatpush.bf16.msra.mxu0 0
      %406 = vmatpush.bf16.msra.mxu0 0
      %407 = vmatpush.bf16.msra.mxu0 0
      %408 = vmatpush.bf16.msra.mxu0 0
      %409 = vmatpush.bf16.msra.mxu0 0
      %410 = vmatpush.bf16.msra.mxu0 0
      %411 = vmatpush.bf16.msra.mxu0 0
      %412 = vmatpush.bf16.msra.mxu0 %v397
      %413 = vmatmul.bf16.gmra.mxu0 %v393
      %v414 = vpop.f32.mrf.mxu0
      %v415 = vadd.f32 %v371, %v414
      %v416 = vpop.f32.mrf.mxu0
      %v417 = vadd.f32 %v376, %v416
      %418 = vdwg.mxu0
      %419 = vmatpush.bf16.msra.mxu0 0
      %420 = vmatpush.bf16.msra.mxu0 0
      %421 = vmatpush.bf16.msra.mxu0 0
      %422 = vmatpush.bf16.msra.mxu0 0
      %423 = vmatpush.bf16.msra.mxu0 0
      %424 = vmatpush.bf16.msra.mxu0 0
      %425 = vmatpush.bf16.msra.mxu0 0
      %426 = vmatpush.bf16.msra.mxu0 %v400
      %427 = vmatmul.bf16.gmra.mxu0 %v393
      %v428 = vpop.f32.mrf.mxu0
      %v429 = vadd.f32 %v371, %v428
      %v430 = vpop.f32.mrf.mxu0
      %v431 = vadd.f32 %v376, %v430
      %432 = vdwg.mxu0
      %433 = vmatpush.bf16.msra.mxu0 0
      %434 = vmatpush.bf16.msra.mxu0 0
      %435 = vmatpush.bf16.msra.mxu0 0
      %436 = vmatpush.bf16.msra.mxu0 0
      %437 = vmatpush.bf16.msra.mxu0 0
      %438 = vmatpush.bf16.msra.mxu0 0
      %439 = vmatpush.bf16.msra.mxu0 0
      %440 = vmatpush.bf16.msra.mxu0 %v403
      %441 = vmatmul.bf16.gmra.mxu0 %v393
      %v442 = vpop.f32.mrf.mxu0
      %v443 = vadd.f32 %v371, %v442
      %v444 = vpop.f32.mrf.mxu0
      %v445 = vadd.f32 %v376, %v444
      %446 = vdwg.mxu0
      %v447 = vxor.u32 %v415, 2147483648
      %v448 = vxor.u32 %v429, 2147483648
      %v449 = vxor.u32 %v443, 2147483648
      %v450 = vxor.u32 %v417, 2147483648
      %v451 = vxor.u32 %v431, 2147483648
      %v452 = vxor.u32 %v445, 2147483648
      %v453 = vmul.f32 %v447, 1.442695
      %v454 = vpow.pop %v453
      %v455 = vmul.f32 %v448, 1.442695
      %v456 = vpow.pop %v455
      %v457 = vmul.f32 %v449, 1.442695
      %v458 = vpow.pop %v457
      %v459 = vmul.f32 %v450, 1.442695
      %v460 = vpow.pop %v459
      %v461 = vmul.f32 %v451, 1.442695
      %v462 = vpow.pop %v461
      %v463 = vmul.f32 %v452, 1.442695
      %v464 = vpow.pop %v463
      %v465 = vadd.f32 %v454, 1.0
      %v466 = vadd.f32 %v456, 1.0
      %v467 = vadd.f32 %v458, 1.0
      %v468 = vadd.f32 %v460, 1.0
      %v469 = vadd.f32 %v462, 1.0
      %v470 = vadd.f32 %v464, 1.0
      %v471 = vrcp.pop %v465
      %v472 = vmul.f32 %v465, %v471
      %v473 = vsub.f32 1.0, %v472
      %v474 = vmul.f32 %v471, %v473
      %v475 = vadd.f32 %v471, %v474
      %vm476 = vweird.f32 %v465
      %vm477 = vweird.f32 %v471
      %vm478 = vmor %vm476, %vm477
      %v479 = vsel %vm478, %v471, %v475
      %v480 = vand.u32 2147483647, %v465
      %vm481 = vcmp.eq.f32.partialorder %v480, 8.507059e+37
      %v482 = vand.u32 %v465, 2147483648
      %v483 = vor.u32 1.1754944e-38, %v482
      %v484 = vsel %vm481, %v483, %v479
      %v485 = vmul.f32 1.0, %v484
      %v486 = vrcp.pop %v466
      %v487 = vmul.f32 %v466, %v486
      %v488 = vsub.f32 1.0, %v487
      %v489 = vmul.f32 %v486, %v488
      %v490 = vadd.f32 %v486, %v489
      %vm491 = vweird.f32 %v466
      %vm492 = vweird.f32 %v486
      %vm493 = vmor %vm491, %vm492
      %v494 = vsel %vm493, %v486, %v490
      %v495 = vand.u32 2147483647, %v466
      %vm496 = vcmp.eq.f32.partialorder %v495, 8.507059e+37
      %v497 = vand.u32 %v466, 2147483648
      %v498 = vor.u32 1.1754944e-38, %v497
      %v499 = vsel %vm496, %v498, %v494
      %v500 = vmul.f32 1.0, %v499
      %v501 = vrcp.pop %v467
      %v502 = vmul.f32 %v467, %v501
      %v503 = vsub.f32 1.0, %v502
      %v504 = vmul.f32 %v501, %v503
      %v505 = vadd.f32 %v501, %v504
      %vm506 = vweird.f32 %v467
      %vm507 = vweird.f32 %v501
      %vm508 = vmor %vm506, %vm507
      %v509 = vsel %vm508, %v501, %v505
      %v510 = vand.u32 2147483647, %v467
      %vm511 = vcmp.eq.f32.partialorder %v510, 8.507059e+37
      %v512 = vand.u32 %v467, 2147483648
      %v513 = vor.u32 1.1754944e-38, %v512
      %v514 = vsel %vm511, %v513, %v509
      %v515 = vmul.f32 1.0, %v514
      %v516 = vrcp.pop %v468
      %v517 = vmul.f32 %v468, %v516
      %v518 = vsub.f32 1.0, %v517
      %v519 = vmul.f32 %v516, %v518
      %v520 = vadd.f32 %v516, %v519
      %vm521 = vweird.f32 %v468
      %vm522 = vweird.f32 %v516
      %vm523 = vmor %vm521, %vm522
      %v524 = vsel %vm523, %v516, %v520
      %v525 = vand.u32 2147483647, %v468
      %vm526 = vcmp.eq.f32.partialorder %v525, 8.507059e+37
      %v527 = vand.u32 %v468, 2147483648
      %v528 = vor.u32 1.1754944e-38, %v527
      %v529 = vsel %vm526, %v528, %v524
      %v530 = vmul.f32 1.0, %v529
      %v531 = vrcp.pop %v469
      %v532 = vmul.f32 %v469, %v531
      %v533 = vsub.f32 1.0, %v532
      %v534 = vmul.f32 %v531, %v533
      %v535 = vadd.f32 %v531, %v534
      %vm536 = vweird.f32 %v469
      %vm537 = vweird.f32 %v531
      %vm538 = vmor %vm536, %vm537
      %v539 = vsel %vm538, %v531, %v535
      %v540 = vand.u32 2147483647, %v469
      %vm541 = vcmp.eq.f32.partialorder %v540, 8.507059e+37
      %v542 = vand.u32 %v469, 2147483648
      %v543 = vor.u32 1.1754944e-38, %v542
      %v544 = vsel %vm541, %v543, %v539
      %v545 = vmul.f32 1.0, %v544
      %v546 = vrcp.pop %v470
      %v547 = vmul.f32 %v470, %v546
      %v548 = vsub.f32 1.0, %v547
      %v549 = vmul.f32 %v546, %v548
      %v550 = vadd.f32 %v546, %v549
      %vm551 = vweird.f32 %v470
      %vm552 = vweird.f32 %v546
      %vm553 = vmor %vm551, %vm552
      %v554 = vsel %vm553, %v546, %v550
      %v555 = vand.u32 2147483647, %v470
      %vm556 = vcmp.eq.f32.partialorder %v555, 8.507059e+37
      %v557 = vand.u32 %v470, 2147483648
      %v558 = vor.u32 1.1754944e-38, %v557
      %v559 = vsel %vm556, %v558, %v554
      %v560 = vmul.f32 1.0, %v559
      %v561 = vmul.f32 %v415, %v485
      %v562 = vmul.f32 %v429, %v500
      %v563 = vmul.f32 %v443, %v515
      %v564 = vmul.f32 %v417, %v530
      %v565 = vmul.f32 %v431, %v545
      %v566 = vmul.f32 %v445, %v560
      %v568 = vperm.slane %v363, 0
      %v569 = vperm.slane %v363, 1
      %v570 = vperm.slane %v363, 2
      %v574 = vmul.f32 %v561, %v568
      %v575 = vmul.f32 %v562, %v569
      %v576 = vmul.f32 %v563, %v570
      %v577 = vmul.f32 %v564, %v568
      %v578 = vmul.f32 %v565, %v569
      %v579 = vmul.f32 %v566, %v570
      %581 = vrot.lane.b32.xlu0 %v579, 19
      %v582 = vpop.permute.xlu0 %581
      %586 = vrot.lane.b32.xlu0 %v577, 19
      %v587 = vpop.permute.xlu0 %586
      %588 = vrot.lane.b32.xlu0 %v578, 19
      %v589 = vpop.permute.xlu0 %588
      %vm590 = vcmask 154624
      %v591 = vsel %vm590, %v587, %v589
      %v592 = vsel %vm590, %v589, %v582
      %v596 = vsel %vm590, %v582, %v587
      %v597 = vpack.c.bf16 %v596, %v596
      %v598 = vpack.c.bf16 %v591, %v591
      %v599 = vpack.c.bf16 %v592, %v592
      %v600 = vld [vmem:[%s6] sm:$0xf]
      %601 = vrot.lane.b32.xlu0 %v579, 18
      %v602 = vpop.permute.xlu0 %601
      %604 = vrot.lane.b32.xlu0 %v577, 18
      %v605 = vpop.permute.xlu0 %604
      %606 = vrot.lane.b32.xlu0 %v578, 18
      %v607 = vpop.permute.xlu0 %606
      %vm608 = vcmask 146432
      %v609 = vsel %vm608, %v605, %v607
      %v610 = vsel %vm608, %v607, %v602
      %v614 = vsel %vm608, %v602, %v605
      %v615 = vpack.c.bf16 %v614, %v614
      %v616 = vpack.c.bf16 %v609, %v609
      %v617 = vpack.c.bf16 %v610, %v610
      %s618 = scalar_lea.vmem %s6, 4
      %v619 = vld [vmem:[%s618] sm:$0xf]
      %v621 = vsel %vm391, %v619, 0
      %v624 = vsel %vm395, %v615, 0
      %v627 = vsel %vm395, %v616, 0
      %v630 = vsel %vm395, %v617, 0
      %632 = vmatpush.bf16.msra.mxu0 0
      %633 = vmatpush.bf16.msra.mxu0 0
      %634 = vmatpush.bf16.msra.mxu0 0
      %635 = vmatpush.bf16.msra.mxu0 0
      %636 = vmatpush.bf16.msra.mxu0 0
      %637 = vmatpush.bf16.msra.mxu0 0
      %638 = vmatpush.bf16.msra.mxu0 0
      %639 = vmatpush.bf16.msra.mxu0 %v624
      %640 = vmatmul.bf16.gmra.mxu0 %v621
      %v641 = vpop.f32.mrf.mxu0
      %v642 = vadd.f32 0.0, %v641
      %v643 = vpop.f32.mrf.mxu0
      %644 = vdwg.mxu0
      %645 = vmatpush.bf16.msra.mxu0 0
      %646 = vmatpush.bf16.msra.mxu0 0
      %647 = vmatpush.bf16.msra.mxu0 0
      %648 = vmatpush.bf16.msra.mxu0 0
      %649 = vmatpush.bf16.msra.mxu0 0
      %650 = vmatpush.bf16.msra.mxu0 0
      %651 = vmatpush.bf16.msra.mxu0 0
      %652 = vmatpush.bf16.msra.mxu0 %v627
      %653 = vmatmul.bf16.gmra.mxu0 %v621
      %v654 = vpop.f32.mrf.mxu0
      %v655 = vadd.f32 0.0, %v654
      %v656 = vpop.f32.mrf.mxu0
      %657 = vdwg.mxu0
      %658 = vmatpush.bf16.msra.mxu0 0
      %659 = vmatpush.bf16.msra.mxu0 0
      %660 = vmatpush.bf16.msra.mxu0 0
      %661 = vmatpush.bf16.msra.mxu0 0
      %662 = vmatpush.bf16.msra.mxu0 0
      %663 = vmatpush.bf16.msra.mxu0 0
      %664 = vmatpush.bf16.msra.mxu0 0
      %665 = vmatpush.bf16.msra.mxu0 %v630
      %666 = vmatmul.bf16.gmra.mxu0 %v621
      %v667 = vpop.f32.mrf.mxu0
      %v668 = vadd.f32 0.0, %v667
      %v669 = vpop.f32.mrf.mxu0
      %670 = vdwg.mxu0
      %v672 = vsel %vm391, %v600, 0
      %v675 = vsel %vm395, %v597, 0
      %v678 = vsel %vm395, %v598, 0
      %v681 = vsel %vm395, %v599, 0
      %683 = vmatpush.bf16.msra.mxu0 0
      %684 = vmatpush.bf16.msra.mxu0 0
      %685 = vmatpush.bf16.msra.mxu0 0
      %686 = vmatpush.bf16.msra.mxu0 0
      %687 = vmatpush.bf16.msra.mxu0 0
      %688 = vmatpush.bf16.msra.mxu0 0
      %689 = vmatpush.bf16.msra.mxu0 0
      %690 = vmatpush.bf16.msra.mxu0 %v675
      %691 = vmatmul.bf16.gmra.mxu0 %v672
      %v692 = vpop.f32.mrf.mxu0
      %v693 = vadd.f32 %v642, %v692
      %v694 = vpop.f32.mrf.mxu0
      %695 = vdwg.mxu0
      %696 = vmatpush.bf16.msra.mxu0 0
      %697 = vmatpush.bf16.msra.mxu0 0
      %698 = vmatpush.bf16.msra.mxu0 0
      %699 = vmatpush.bf16.msra.mxu0 0
      %700 = vmatpush.bf16.msra.mxu0 0
      %701 = vmatpush.bf16.msra.mxu0 0
      %702 = vmatpush.bf16.msra.mxu0 0
      %703 = vmatpush.bf16.msra.mxu0 %v678
      %704 = vmatmul.bf16.gmra.mxu0 %v672
      %v705 = vpop.f32.mrf.mxu0
      %v706 = vadd.f32 %v655, %v705
      %v707 = vpop.f32.mrf.mxu0
      %708 = vdwg.mxu0
      %709 = vmatpush.bf16.msra.mxu0 0
      %710 = vmatpush.bf16.msra.mxu0 0
      %711 = vmatpush.bf16.msra.mxu0 0
      %712 = vmatpush.bf16.msra.mxu0 0
      %713 = vmatpush.bf16.msra.mxu0 0
      %714 = vmatpush.bf16.msra.mxu0 0
      %715 = vmatpush.bf16.msra.mxu0 0
      %716 = vmatpush.bf16.msra.mxu0 %v681
      %717 = vmatmul.bf16.gmra.mxu0 %v672
      %v718 = vpop.f32.mrf.mxu0
      %v719 = vadd.f32 %v668, %v718
      %v720 = vpop.f32.mrf.mxu0
      %721 = vdwg.mxu0
      %722 = vrot.lane.b32.xlu0 %v579, 17
      %v723 = vpop.permute.xlu0 %722
      %725 = vrot.lane.b32.xlu0 %v577, 17
      %v726 = vpop.permute.xlu0 %725
      %727 = vrot.lane.b32.xlu0 %v578, 17
      %v728 = vpop.permute.xlu0 %727
      %vm729 = vcmask 138240
      %v730 = vsel %vm729, %v726, %v728
      %v731 = vsel %vm729, %v728, %v723
      %v735 = vsel %vm729, %v723, %v726
      %v736 = vpack.c.bf16 %v735, %v735
      %v737 = vpack.c.bf16 %v730, %v730
      %v738 = vpack.c.bf16 %v731, %v731
      %s739 = scalar_lea.vmem %s6, 8
      %v740 = vld [vmem:[%s739] sm:$0xf]
      %v742 = vsel %vm391, %v740, 0
      %v745 = vsel %vm395, %v736, 0
      %v748 = vsel %vm395, %v737, 0
      %v751 = vsel %vm395, %v738, 0
      %753 = vmatpush.bf16.msra.mxu0 0
      %754 = vmatpush.bf16.msra.mxu0 0
      %755 = vmatpush.bf16.msra.mxu0 0
      %756 = vmatpush.bf16.msra.mxu0 0
      %757 = vmatpush.bf16.msra.mxu0 0
      %758 = vmatpush.bf16.msra.mxu0 0
      %759 = vmatpush.bf16.msra.mxu0 0
      %760 = vmatpush.bf16.msra.mxu0 %v745
      %761 = vmatmul.bf16.gmra.mxu0 %v742
      %v762 = vpop.f32.mrf.mxu0
      %v763 = vadd.f32 0.0, %v762
      %v764 = vpop.f32.mrf.mxu0
      %765 = vdwg.mxu0
      %766 = vmatpush.bf16.msra.mxu0 0
      %767 = vmatpush.bf16.msra.mxu0 0
      %768 = vmatpush.bf16.msra.mxu0 0
      %769 = vmatpush.bf16.msra.mxu0 0
      %770 = vmatpush.bf16.msra.mxu0 0
      %771 = vmatpush.bf16.msra.mxu0 0
      %772 = vmatpush.bf16.msra.mxu0 0
      %773 = vmatpush.bf16.msra.mxu0 %v748
      %774 = vmatmul.bf16.gmra.mxu0 %v742
      %v775 = vpop.f32.mrf.mxu0
      %v776 = vadd.f32 0.0, %v775
      %v777 = vpop.f32.mrf.mxu0
      %778 = vdwg.mxu0
      %779 = vmatpush.bf16.msra.mxu0 0
      %780 = vmatpush.bf16.msra.mxu0 0
      %781 = vmatpush.bf16.msra.mxu0 0
      %782 = vmatpush.bf16.msra.mxu0 0
      %783 = vmatpush.bf16.msra.mxu0 0
      %784 = vmatpush.bf16.msra.mxu0 0
      %785 = vmatpush.bf16.msra.mxu0 0
      %786 = vmatpush.bf16.msra.mxu0 %v751
      %787 = vmatmul.bf16.gmra.mxu0 %v742
      %v788 = vpop.f32.mrf.mxu0
      %v789 = vadd.f32 0.0, %v788
      %v790 = vpop.f32.mrf.mxu0
      %791 = vdwg.mxu0
      %v792 = vadd.f32 %v693, %v763
      %v793 = vadd.f32 %v706, %v776
      %v794 = vadd.f32 %v719, %v789
      %795 = vrot.lane.b32.xlu0 %v579, 1
      %v796 = vpop.permute.xlu0 %795
      %798 = vrot.lane.b32.xlu0 %v577, 1
      %v799 = vpop.permute.xlu0 %798
      %800 = vrot.lane.b32.xlu0 %v578, 1
      %v801 = vpop.permute.xlu0 %800
      %vm802 = vcmask 7168
      %v803 = vsel %vm802, %v799, %v801
      %v804 = vsel %vm802, %v801, %v796
      %v808 = vsel %vm802, %v796, %v799
      %v809 = vpack.c.bf16 %v808, %v808
      %v810 = vpack.c.bf16 %v803, %v803
      %v811 = vpack.c.bf16 %v804, %v804
      %s812 = scalar_lea.vmem %s6, 12
      %v813 = vld [vmem:[%s812] sm:$0xf]
      %v815 = vsel %vm391, %v813, 0
      %v818 = vsel %vm395, %v809, 0
      %v821 = vsel %vm395, %v810, 0
      %v824 = vsel %vm395, %v811, 0
      %826 = vmatpush.bf16.msra.mxu0 0
      %827 = vmatpush.bf16.msra.mxu0 0
      %828 = vmatpush.bf16.msra.mxu0 0
      %829 = vmatpush.bf16.msra.mxu0 0
      %830 = vmatpush.bf16.msra.mxu0 0
      %831 = vmatpush.bf16.msra.mxu0 0
      %832 = vmatpush.bf16.msra.mxu0 0
      %833 = vmatpush.bf16.msra.mxu0 %v818
      %834 = vmatmul.bf16.gmra.mxu0 %v815
      %v835 = vpop.f32.mrf.mxu0
      %v836 = vadd.f32 0.0, %v835
      %v837 = vpop.f32.mrf.mxu0
      %838 = vdwg.mxu0
      %839 = vmatpush.bf16.msra.mxu0 0
      %840 = vmatpush.bf16.msra.mxu0 0
      %841 = vmatpush.bf16.msra.mxu0 0
      %842 = vmatpush.bf16.msra.mxu0 0
      %843 = vmatpush.bf16.msra.mxu0 0
      %844 = vmatpush.bf16.msra.mxu0 0
      %845 = vmatpush.bf16.msra.mxu0 0
      %846 = vmatpush.bf16.msra.mxu0 %v821
      %847 = vmatmul.bf16.gmra.mxu0 %v815
      %v848 = vpop.f32.mrf.mxu0
      %v849 = vadd.f32 0.0, %v848
      %v850 = vpop.f32.mrf.mxu0
      %851 = vdwg.mxu0
      %852 = vmatpush.bf16.msra.mxu0 0
      %853 = vmatpush.bf16.msra.mxu0 0
      %854 = vmatpush.bf16.msra.mxu0 0
      %855 = vmatpush.bf16.msra.mxu0 0
      %856 = vmatpush.bf16.msra.mxu0 0
      %857 = vmatpush.bf16.msra.mxu0 0
      %858 = vmatpush.bf16.msra.mxu0 0
      %859 = vmatpush.bf16.msra.mxu0 %v824
      %860 = vmatmul.bf16.gmra.mxu0 %v815
      %v861 = vpop.f32.mrf.mxu0
      %v862 = vadd.f32 0.0, %v861
      %v863 = vpop.f32.mrf.mxu0
      %864 = vdwg.mxu0
      %v865 = vadd.f32 %v792, %v836
      %v866 = vadd.f32 %v793, %v849
      %v867 = vadd.f32 %v794, %v862
      %v868 = vpack.c.bf16 %v577, %v577
      %v869 = vpack.c.bf16 %v578, %v578
      %v870 = vpack.c.bf16 %v579, %v579
      %s871 = scalar_lea.vmem %s6, 16
      %v872 = vld [vmem:[%s871] sm:$0xf]
      %v874 = vsel %vm391, %v872, 0
      %v877 = vsel %vm395, %v868, 0
      %v880 = vsel %vm395, %v869, 0
      %v883 = vsel %vm395, %v870, 0
      %885 = vmatpush.bf16.msra.mxu0 0
      %886 = vmatpush.bf16.msra.mxu0 0
      %887 = vmatpush.bf16.msra.mxu0 0
      %888 = vmatpush.bf16.msra.mxu0 0
      %889 = vmatpush.bf16.msra.mxu0 0
      %890 = vmatpush.bf16.msra.mxu0 0
      %891 = vmatpush.bf16.msra.mxu0 0
      %892 = vmatpush.bf16.msra.mxu0 %v877
      %893 = vmatmul.bf16.gmra.mxu0 %v874
      %v894 = vpop.f32.mrf.mxu0
      %v895 = vadd.f32 0.0, %v894
      %v896 = vpop.f32.mrf.mxu0
      %897 = vdwg.mxu0
      %898 = vmatpush.bf16.msra.mxu0 0
      %899 = vmatpush.bf16.msra.mxu0 0
      %900 = vmatpush.bf16.msra.mxu0 0
      %901 = vmatpush.bf16.msra.mxu0 0
      %902 = vmatpush.bf16.msra.mxu0 0
      %903 = vmatpush.bf16.msra.mxu0 0
      %904 = vmatpush.bf16.msra.mxu0 0
      %905 = vmatpush.bf16.msra.mxu0 %v880
      %906 = vmatmul.bf16.gmra.mxu0 %v874
      %v907 = vpop.f32.mrf.mxu0
      %v908 = vadd.f32 0.0, %v907
      %v909 = vpop.f32.mrf.mxu0
      %910 = vdwg.mxu0
      %911 = vmatpush.bf16.msra.mxu0 0
      %912 = vmatpush.bf16.msra.mxu0 0
      %913 = vmatpush.bf16.msra.mxu0 0
      %914 = vmatpush.bf16.msra.mxu0 0
      %915 = vmatpush.bf16.msra.mxu0 0
      %916 = vmatpush.bf16.msra.mxu0 0
      %917 = vmatpush.bf16.msra.mxu0 0
      %918 = vmatpush.bf16.msra.mxu0 %v883
      %919 = vmatmul.bf16.gmra.mxu0 %v874
      %v920 = vpop.f32.mrf.mxu0
      %v921 = vadd.f32 0.0, %v920
      %v922 = vpop.f32.mrf.mxu0
      %923 = vdwg.mxu0
      %v924 = vadd.f32 %v865, %v895
      %v925 = vadd.f32 %v866, %v908
      %v926 = vadd.f32 %v867, %v921
      %927 = vrot.lane.b32.xlu0 %v577, 127
      %v928 = vpop.permute.xlu0 %927
      %929 = vrot.lane.b32.xlu0 %v578, 127
      %v930 = vpop.permute.xlu0 %929
      %931 = vrot.lane.b32.xlu0 %v579, 127
      %v932 = vpop.permute.xlu0 %931
      %vm933 = vcmask 1039360
      %v934 = vsel %vm933, %v928, %v930
      %v935 = vsel %vm933, %v930, %v932
      %v940 = vsel %vm933, %v932, %v928
      %v941 = vpack.c.bf16 %v934, %v934
      %v942 = vpack.c.bf16 %v935, %v935
      %v943 = vpack.c.bf16 %v940, %v940
      %s944 = scalar_lea.vmem %s6, 20
      %v945 = vld [vmem:[%s944] sm:$0xf]
      %v947 = vsel %vm391, %v945, 0
      %v950 = vsel %vm395, %v941, 0
      %v953 = vsel %vm395, %v942, 0
      %v956 = vsel %vm395, %v943, 0
      %958 = vmatpush.bf16.msra.mxu0 0
      %959 = vmatpush.bf16.msra.mxu0 0
      %960 = vmatpush.bf16.msra.mxu0 0
      %961 = vmatpush.bf16.msra.mxu0 0
      %962 = vmatpush.bf16.msra.mxu0 0
      %963 = vmatpush.bf16.msra.mxu0 0
      %964 = vmatpush.bf16.msra.mxu0 0
      %965 = vmatpush.bf16.msra.mxu0 %v950
      %966 = vmatmul.bf16.gmra.mxu0 %v947
      %v967 = vpop.f32.mrf.mxu0
      %v968 = vadd.f32 0.0, %v967
      %v969 = vpop.f32.mrf.mxu0
      %970 = vdwg.mxu0
      %971 = vmatpush.bf16.msra.mxu0 0
      %972 = vmatpush.bf16.msra.mxu0 0
      %973 = vmatpush.bf16.msra.mxu0 0
      %974 = vmatpush.bf16.msra.mxu0 0
      %975 = vmatpush.bf16.msra.mxu0 0
      %976 = vmatpush.bf16.msra.mxu0 0
      %977 = vmatpush.bf16.msra.mxu0 0
      %978 = vmatpush.bf16.msra.mxu0 %v953
      %979 = vmatmul.bf16.gmra.mxu0 %v947
      %v980 = vpop.f32.mrf.mxu0
      %v981 = vadd.f32 0.0, %v980
      %v982 = vpop.f32.mrf.mxu0
      %983 = vdwg.mxu0
      %984 = vmatpush.bf16.msra.mxu0 0
      %985 = vmatpush.bf16.msra.mxu0 0
      %986 = vmatpush.bf16.msra.mxu0 0
      %987 = vmatpush.bf16.msra.mxu0 0
      %988 = vmatpush.bf16.msra.mxu0 0
      %989 = vmatpush.bf16.msra.mxu0 0
      %990 = vmatpush.bf16.msra.mxu0 0
      %991 = vmatpush.bf16.msra.mxu0 %v956
      %992 = vmatmul.bf16.gmra.mxu0 %v947
      %v993 = vpop.f32.mrf.mxu0
      %v994 = vadd.f32 0.0, %v993
      %v995 = vpop.f32.mrf.mxu0
      %996 = vdwg.mxu0
      %v997 = vadd.f32 %v924, %v968
      %v998 = vadd.f32 %v925, %v981
      %v999 = vadd.f32 %v926, %v994
      %1000 = vrot.lane.b32.xlu0 %v577, 111
      %v1001 = vpop.permute.xlu0 %1000
      %1002 = vrot.lane.b32.xlu0 %v578, 111
      %v1003 = vpop.permute.xlu0 %1002
      %1004 = vrot.lane.b32.xlu0 %v579, 111
      %v1005 = vpop.permute.xlu0 %1004
      %vm1006 = vcmask 908288
      %v1007 = vsel %vm1006, %v1001, %v1003
      %v1008 = vsel %vm1006, %v1003, %v1005
      %v1013 = vsel %vm1006, %v1005, %v1001
      %v1014 = vpack.c.bf16 %v1007, %v1007
      %v1015 = vpack.c.bf16 %v1008, %v1008
      %v1016 = vpack.c.bf16 %v1013, %v1013
      %s1017 = scalar_lea.vmem %s6, 24
      %v1018 = vld [vmem:[%s1017] sm:$0xf]
      %v1020 = vsel %vm391, %v1018, 0
      %v1023 = vsel %vm395, %v1014, 0
      %v1026 = vsel %vm395, %v1015, 0
      %v1029 = vsel %vm395, %v1016, 0
      %1031 = vmatpush.bf16.msra.mxu0 0
      %1032 = vmatpush.bf16.msra.mxu0 0
      %1033 = vmatpush.bf16.msra.mxu0 0
      %1034 = vmatpush.bf16.msra.mxu0 0
      %1035 = vmatpush.bf16.msra.mxu0 0
      %1036 = vmatpush.bf16.msra.mxu0 0
      %1037 = vmatpush.bf16.msra.mxu0 0
      %1038 = vmatpush.bf16.msra.mxu0 %v1023
      %1039 = vmatmul.bf16.gmra.mxu0 %v1020
      %v1040 = vpop.f32.mrf.mxu0
      %v1041 = vadd.f32 0.0, %v1040
      %v1042 = vpop.f32.mrf.mxu0
      %1043 = vdwg.mxu0
      %1044 = vmatpush.bf16.msra.mxu0 0
      %1045 = vmatpush.bf16.msra.mxu0 0
      %1046 = vmatpush.bf16.msra.mxu0 0
      %1047 = vmatpush.bf16.msra.mxu0 0
      %1048 = vmatpush.bf16.msra.mxu0 0
      %1049 = vmatpush.bf16.msra.mxu0 0
      %1050 = vmatpush.bf16.msra.mxu0 0
      %1051 = vmatpush.bf16.msra.mxu0 %v1026
      %1052 = vmatmul.bf16.gmra.mxu0 %v1020
      %v1053 = vpop.f32.mrf.mxu0
      %v1054 = vadd.f32 0.0, %v1053
      %v1055 = vpop.f32.mrf.mxu0
      %1056 = vdwg.mxu0
      %1057 = vmatpush.bf16.msra.mxu0 0
      %1058 = vmatpush.bf16.msra.mxu0 0
      %1059 = vmatpush.bf16.msra.mxu0 0
      %1060 = vmatpush.bf16.msra.mxu0 0
      %1061 = vmatpush.bf16.msra.mxu0 0
      %1062 = vmatpush.bf16.msra.mxu0 0
      %1063 = vmatpush.bf16.msra.mxu0 0
      %1064 = vmatpush.bf16.msra.mxu0 %v1029
      %1065 = vmatmul.bf16.gmra.mxu0 %v1020
      %v1066 = vpop.f32.mrf.mxu0
      %v1067 = vadd.f32 0.0, %v1066
      %v1068 = vpop.f32.mrf.mxu0
      %1069 = vdwg.mxu0
      %v1070 = vadd.f32 %v997, %v1041
      %v1071 = vadd.f32 %v998, %v1054
      %v1072 = vadd.f32 %v999, %v1067
      %1073 = vrot.lane.b32.xlu0 %v577, 110
      %v1074 = vpop.permute.xlu0 %1073
      %1075 = vrot.lane.b32.xlu0 %v578, 110
      %v1076 = vpop.permute.xlu0 %1075
      %1077 = vrot.lane.b32.xlu0 %v579, 110
      %v1078 = vpop.permute.xlu0 %1077
      %vm1079 = vcmask 900096
      %v1080 = vsel %vm1079, %v1074, %v1076
      %v1081 = vsel %vm1079, %v1076, %v1078
      %v1086 = vsel %vm1079, %v1078, %v1074
      %v1087 = vpack.c.bf16 %v1080, %v1080
      %v1088 = vpack.c.bf16 %v1081, %v1081
      %v1089 = vpack.c.bf16 %v1086, %v1086
      %s1090 = scalar_lea.vmem %s6, 28
      %v1091 = vld [vmem:[%s1090] sm:$0xf]
      %v1093 = vsel %vm391, %v1091, 0
      %v1096 = vsel %vm395, %v1087, 0
      %v1099 = vsel %vm395, %v1088, 0
      %v1102 = vsel %vm395, %v1089, 0
      %1104 = vmatpush.bf16.msra.mxu0 0
      %1105 = vmatpush.bf16.msra.mxu0 0
      %1106 = vmatpush.bf16.msra.mxu0 0
      %1107 = vmatpush.bf16.msra.mxu0 0
      %1108 = vmatpush.bf16.msra.mxu0 0
      %1109 = vmatpush.bf16.msra.mxu0 0
      %1110 = vmatpush.bf16.msra.mxu0 0
      %1111 = vmatpush.bf16.msra.mxu0 %v1096
      %1112 = vmatmul.bf16.gmra.mxu0 %v1093
      %v1113 = vpop.f32.mrf.mxu0
      %v1114 = vadd.f32 0.0, %v1113
      %v1115 = vpop.f32.mrf.mxu0
      %1116 = vdwg.mxu0
      %1117 = vmatpush.bf16.msra.mxu0 0
      %1118 = vmatpush.bf16.msra.mxu0 0
      %1119 = vmatpush.bf16.msra.mxu0 0
      %1120 = vmatpush.bf16.msra.mxu0 0
      %1121 = vmatpush.bf16.msra.mxu0 0
      %1122 = vmatpush.bf16.msra.mxu0 0
      %1123 = vmatpush.bf16.msra.mxu0 0
      %1124 = vmatpush.bf16.msra.mxu0 %v1099
      %1125 = vmatmul.bf16.gmra.mxu0 %v1093
      %v1126 = vpop.f32.mrf.mxu0
      %v1127 = vadd.f32 0.0, %v1126
      %v1128 = vpop.f32.mrf.mxu0
      %1129 = vdwg.mxu0
      %1130 = vmatpush.bf16.msra.mxu0 0
      %1131 = vmatpush.bf16.msra.mxu0 0
      %1132 = vmatpush.bf16.msra.mxu0 0
      %1133 = vmatpush.bf16.msra.mxu0 0
      %1134 = vmatpush.bf16.msra.mxu0 0
      %1135 = vmatpush.bf16.msra.mxu0 0
      %1136 = vmatpush.bf16.msra.mxu0 0
      %1137 = vmatpush.bf16.msra.mxu0 %v1102
      %1138 = vmatmul.bf16.gmra.mxu0 %v1093
      %v1139 = vpop.f32.mrf.mxu0
      %v1140 = vadd.f32 0.0, %v1139
      %v1141 = vpop.f32.mrf.mxu0
      %1142 = vdwg.mxu0
      %v1143 = vadd.f32 %v1070, %v1114
      %v1144 = vadd.f32 %v1071, %v1127
      %v1145 = vadd.f32 %v1072, %v1140
      %1146 = vrot.lane.b32.xlu0 %v577, 109
      %v1147 = vpop.permute.xlu0 %1146
      %1148 = vrot.lane.b32.xlu0 %v578, 109
      %v1149 = vpop.permute.xlu0 %1148
      %1150 = vrot.lane.b32.xlu0 %v579, 109
      %v1151 = vpop.permute.xlu0 %1150
      %vm1152 = vcmask 891904
      %v1153 = vsel %vm1152, %v1147, %v1149
      %v1154 = vsel %vm1152, %v1149, %v1151
      %v1159 = vsel %vm1152, %v1151, %v1147
      %v1160 = vpack.c.bf16 %v1153, %v1153
      %v1161 = vpack.c.bf16 %v1154, %v1154
      %v1162 = vpack.c.bf16 %v1159, %v1159
      %s1163 = scalar_lea.vmem %s6, 32
      %v1164 = vld [vmem:[%s1163] sm:$0xf]
      %v1166 = vsel %vm391, %v1164, 0
      %v1169 = vsel %vm395, %v1160, 0
      %v1172 = vsel %vm395, %v1161, 0
      %v1175 = vsel %vm395, %v1162, 0
      %1177 = vmatpush.bf16.msra.mxu0 0
      %1178 = vmatpush.bf16.msra.mxu0 0
      %1179 = vmatpush.bf16.msra.mxu0 0
      %1180 = vmatpush.bf16.msra.mxu0 0
      %1181 = vmatpush.bf16.msra.mxu0 0
      %1182 = vmatpush.bf16.msra.mxu0 0
      %1183 = vmatpush.bf16.msra.mxu0 0
      %1184 = vmatpush.bf16.msra.mxu0 %v1169
      %1185 = vmatmul.bf16.gmra.mxu0 %v1166
      %v1186 = vpop.f32.mrf.mxu0
      %v1187 = vadd.f32 0.0, %v1186
      %v1188 = vpop.f32.mrf.mxu0
      %1189 = vdwg.mxu0
      %1190 = vmatpush.bf16.msra.mxu0 0
      %1191 = vmatpush.bf16.msra.mxu0 0
      %1192 = vmatpush.bf16.msra.mxu0 0
      %1193 = vmatpush.bf16.msra.mxu0 0
      %1194 = vmatpush.bf16.msra.mxu0 0
      %1195 = vmatpush.bf16.msra.mxu0 0
      %1196 = vmatpush.bf16.msra.mxu0 0
      %1197 = vmatpush.bf16.msra.mxu0 %v1172
      %1198 = vmatmul.bf16.gmra.mxu0 %v1166
      %v1199 = vpop.f32.mrf.mxu0
      %v1200 = vadd.f32 0.0, %v1199
      %v1201 = vpop.f32.mrf.mxu0
      %1202 = vdwg.mxu0
      %1203 = vmatpush.bf16.msra.mxu0 0
      %1204 = vmatpush.bf16.msra.mxu0 0
      %1205 = vmatpush.bf16.msra.mxu0 0
      %1206 = vmatpush.bf16.msra.mxu0 0
      %1207 = vmatpush.bf16.msra.mxu0 0
      %1208 = vmatpush.bf16.msra.mxu0 0
      %1209 = vmatpush.bf16.msra.mxu0 0
      %1210 = vmatpush.bf16.msra.mxu0 %v1175
      %1211 = vmatmul.bf16.gmra.mxu0 %v1166
      %v1212 = vpop.f32.mrf.mxu0
      %v1213 = vadd.f32 0.0, %v1212
      %v1214 = vpop.f32.mrf.mxu0
      %1215 = vdwg.mxu0
      %v1216 = vadd.f32 %v1143, %v1187
      %v1217 = vadd.f32 %v1144, %v1200
      %v1218 = vadd.f32 %v1145, %v1213
      %v1219 = vld [vmem:[%s7] sm:$0xff]
      %1221 = vset.pattern.permute.xlu0 0
      %1222 = vperm.xlu0 %1221, %v1219
      %v1223 = vpop.permute.xlu0 %1222
      %v1225 = vadd.f32 %v1216, %v1223
      %v1226 = vadd.f32 %v1217, %v1223
      %v1227 = vadd.f32 %v1218, %v1223
      %v1228 = vxor.u32 %v1225, 2147483648
      %v1229 = vxor.u32 %v1226, 2147483648
      %v1230 = vxor.u32 %v1227, 2147483648
      %v1231 = vmul.f32 %v1228, 1.442695
      %v1232 = vpow.pop %v1231
      %v1233 = vmul.f32 %v1229, 1.442695
      %v1234 = vpow.pop %v1233
      %v1235 = vmul.f32 %v1230, 1.442695
      %v1236 = vpow.pop %v1235
      %v1237 = vadd.f32 %v1232, 1.0
      %v1238 = vadd.f32 %v1234, 1.0
      %v1239 = vadd.f32 %v1236, 1.0
      %v1240 = vrcp.pop %v1237
      %v1241 = vmul.f32 %v1237, %v1240
      %v1242 = vsub.f32 1.0, %v1241
      %v1243 = vmul.f32 %v1240, %v1242
      %v1244 = vadd.f32 %v1240, %v1243
      %vm1245 = vweird.f32 %v1237
      %vm1246 = vweird.f32 %v1240
      %vm1247 = vmor %vm1245, %vm1246
      %v1248 = vsel %vm1247, %v1240, %v1244
      %v1249 = vand.u32 2147483647, %v1237
      %vm1250 = vcmp.eq.f32.partialorder %v1249, 8.507059e+37
      %v1251 = vand.u32 %v1237, 2147483648
      %v1252 = vor.u32 1.1754944e-38, %v1251
      %v1253 = vsel %vm1250, %v1252, %v1248
      %v1254 = vmul.f32 1.0, %v1253
      %v1255 = vrcp.pop %v1238
      %v1256 = vmul.f32 %v1238, %v1255
      %v1257 = vsub.f32 1.0, %v1256
      %v1258 = vmul.f32 %v1255, %v1257
      %v1259 = vadd.f32 %v1255, %v1258
      %vm1260 = vweird.f32 %v1238
      %vm1261 = vweird.f32 %v1255
      %vm1262 = vmor %vm1260, %vm1261
      %v1263 = vsel %vm1262, %v1255, %v1259
      %v1264 = vand.u32 2147483647, %v1238
      %vm1265 = vcmp.eq.f32.partialorder %v1264, 8.507059e+37
      %v1266 = vand.u32 %v1238, 2147483648
      %v1267 = vor.u32 1.1754944e-38, %v1266
      %v1268 = vsel %vm1265, %v1267, %v1263
      %v1269 = vmul.f32 1.0, %v1268
      %v1270 = vrcp.pop %v1239
      %v1271 = vmul.f32 %v1239, %v1270
      %v1272 = vsub.f32 1.0, %v1271
      %v1273 = vmul.f32 %v1270, %v1272
      %v1274 = vadd.f32 %v1270, %v1273
      %vm1275 = vweird.f32 %v1239
      %vm1276 = vweird.f32 %v1270
      %vm1277 = vmor %vm1275, %vm1276
      %v1278 = vsel %vm1277, %v1270, %v1274
      %v1279 = vand.u32 2147483647, %v1239
      %vm1280 = vcmp.eq.f32.partialorder %v1279, 8.507059e+37
      %v1281 = vand.u32 %v1239, 2147483648
      %v1282 = vor.u32 1.1754944e-38, %v1281
      %v1283 = vsel %vm1280, %v1282, %v1278
      %v1284 = vmul.f32 1.0, %v1283
      %v1285 = vmul.f32 %v1225, %v1254
      %v1286 = vmul.f32 %v1226, %v1269
      %v1287 = vmul.f32 %v1227, %v1284
      %v1288 = vmul.f32 %v1285, %v568
      %v1289 = vmul.f32 %v1286, %v569
      %v1290 = vmul.f32 %v1287, %v570
      %1292 = vrot.lane.b32.xlu0 %v1290, 19
      %v1293 = vpop.permute.xlu0 %1292
      %1297 = vrot.lane.b32.xlu0 %v1288, 19
      %v1298 = vpop.permute.xlu0 %1297
      %1299 = vrot.lane.b32.xlu0 %v1289, 19
      %v1300 = vpop.permute.xlu0 %1299
      %v1301 = vsel %vm590, %v1298, %v1300
      %v1302 = vsel %vm590, %v1300, %v1293
      %v1306 = vsel %vm590, %v1293, %v1298
      %v1307 = vpack.c.bf16 %v1306, %v1306
      %v1308 = vpack.c.bf16 %v1301, %v1301
      %v1309 = vpack.c.bf16 %v1302, %v1302
      %v1310 = vld [vmem:[%s8] sm:$0xf]
      %1311 = vrot.lane.b32.xlu0 %v1290, 18
      %v1312 = vpop.permute.xlu0 %1311
      %1314 = vrot.lane.b32.xlu0 %v1288, 18
      %v1315 = vpop.permute.xlu0 %1314
      %1316 = vrot.lane.b32.xlu0 %v1289, 18
      %v1317 = vpop.permute.xlu0 %1316
      %v1318 = vsel %vm608, %v1315, %v1317
      %v1319 = vsel %vm608, %v1317, %v1312
      %v1323 = vsel %vm608, %v1312, %v1315
      %v1324 = vpack.c.bf16 %v1323, %v1323
      %v1325 = vpack.c.bf16 %v1318, %v1318
      %v1326 = vpack.c.bf16 %v1319, %v1319
      %s1327 = scalar_lea.vmem %s8, 4
      %v1328 = vld [vmem:[%s1327] sm:$0xf]
      %v1330 = vsel %vm391, %v1328, 0
      %v1333 = vsel %vm395, %v1324, 0
      %v1336 = vsel %vm395, %v1325, 0
      %v1339 = vsel %vm395, %v1326, 0
      %1341 = vmatpush.bf16.msra.mxu0 0
      %1342 = vmatpush.bf16.msra.mxu0 0
      %1343 = vmatpush.bf16.msra.mxu0 0
      %1344 = vmatpush.bf16.msra.mxu0 0
      %1345 = vmatpush.bf16.msra.mxu0 0
      %1346 = vmatpush.bf16.msra.mxu0 0
      %1347 = vmatpush.bf16.msra.mxu0 0
      %1348 = vmatpush.bf16.msra.mxu0 %v1333
      %1349 = vmatmul.bf16.gmra.mxu0 %v1330
      %v1350 = vpop.f32.mrf.mxu0
      %v1351 = vadd.f32 0.0, %v1350
      %v1352 = vpop.f32.mrf.mxu0
      %1353 = vdwg.mxu0
      %1354 = vmatpush.bf16.msra.mxu0 0
      %1355 = vmatpush.bf16.msra.mxu0 0
      %1356 = vmatpush.bf16.msra.mxu0 0
      %1357 = vmatpush.bf16.msra.mxu0 0
      %1358 = vmatpush.bf16.msra.mxu0 0
      %1359 = vmatpush.bf16.msra.mxu0 0
      %1360 = vmatpush.bf16.msra.mxu0 0
      %1361 = vmatpush.bf16.msra.mxu0 %v1336
      %1362 = vmatmul.bf16.gmra.mxu0 %v1330
      %v1363 = vpop.f32.mrf.mxu0
      %v1364 = vadd.f32 0.0, %v1363
      %v1365 = vpop.f32.mrf.mxu0
      %1366 = vdwg.mxu0
      %1367 = vmatpush.bf16.msra.mxu0 0
      %1368 = vmatpush.bf16.msra.mxu0 0
      %1369 = vmatpush.bf16.msra.mxu0 0
      %1370 = vmatpush.bf16.msra.mxu0 0
      %1371 = vmatpush.bf16.msra.mxu0 0
      %1372 = vmatpush.bf16.msra.mxu0 0
      %1373 = vmatpush.bf16.msra.mxu0 0
      %1374 = vmatpush.bf16.msra.mxu0 %v1339
      %1375 = vmatmul.bf16.gmra.mxu0 %v1330
      %v1376 = vpop.f32.mrf.mxu0
      %v1377 = vadd.f32 0.0, %v1376
      %v1378 = vpop.f32.mrf.mxu0
      %1379 = vdwg.mxu0
      %v1381 = vsel %vm391, %v1310, 0
      %v1384 = vsel %vm395, %v1307, 0
      %v1387 = vsel %vm395, %v1308, 0
      %v1390 = vsel %vm395, %v1309, 0
      %1392 = vmatpush.bf16.msra.mxu0 0
      %1393 = vmatpush.bf16.msra.mxu0 0
      %1394 = vmatpush.bf16.msra.mxu0 0
      %1395 = vmatpush.bf16.msra.mxu0 0
      %1396 = vmatpush.bf16.msra.mxu0 0
      %1397 = vmatpush.bf16.msra.mxu0 0
      %1398 = vmatpush.bf16.msra.mxu0 0
      %1399 = vmatpush.bf16.msra.mxu0 %v1384
      %1400 = vmatmul.bf16.gmra.mxu0 %v1381
      %v1401 = vpop.f32.mrf.mxu0
      %v1402 = vadd.f32 %v1351, %v1401
      %v1403 = vpop.f32.mrf.mxu0
      %1404 = vdwg.mxu0
      %1405 = vmatpush.bf16.msra.mxu0 0
      %1406 = vmatpush.bf16.msra.mxu0 0
      %1407 = vmatpush.bf16.msra.mxu0 0
      %1408 = vmatpush.bf16.msra.mxu0 0
      %1409 = vmatpush.bf16.msra.mxu0 0
      %1410 = vmatpush.bf16.msra.mxu0 0
      %1411 = vmatpush.bf16.msra.mxu0 0
      %1412 = vmatpush.bf16.msra.mxu0 %v1387
      %1413 = vmatmul.bf16.gmra.mxu0 %v1381
      %v1414 = vpop.f32.mrf.mxu0
      %v1415 = vadd.f32 %v1364, %v1414
      %v1416 = vpop.f32.mrf.mxu0
      %1417 = vdwg.mxu0
      %1418 = vmatpush.bf16.msra.mxu0 0
      %1419 = vmatpush.bf16.msra.mxu0 0
      %1420 = vmatpush.bf16.msra.mxu0 0
      %1421 = vmatpush.bf16.msra.mxu0 0
      %1422 = vmatpush.bf16.msra.mxu0 0
      %1423 = vmatpush.bf16.msra.mxu0 0
      %1424 = vmatpush.bf16.msra.mxu0 0
      %1425 = vmatpush.bf16.msra.mxu0 %v1390
      %1426 = vmatmul.bf16.gmra.mxu0 %v1381
      %v1427 = vpop.f32.mrf.mxu0
      %v1428 = vadd.f32 %v1377, %v1427
      %v1429 = vpop.f32.mrf.mxu0
      %1430 = vdwg.mxu0
      %1431 = vrot.lane.b32.xlu0 %v1290, 17
      %v1432 = vpop.permute.xlu0 %1431
      %1434 = vrot.lane.b32.xlu0 %v1288, 17
      %v1435 = vpop.permute.xlu0 %1434
      %1436 = vrot.lane.b32.xlu0 %v1289, 17
      %v1437 = vpop.permute.xlu0 %1436
      %v1438 = vsel %vm729, %v1435, %v1437
      %v1439 = vsel %vm729, %v1437, %v1432
      %v1443 = vsel %vm729, %v1432, %v1435
      %v1444 = vpack.c.bf16 %v1443, %v1443
      %v1445 = vpack.c.bf16 %v1438, %v1438
      %v1446 = vpack.c.bf16 %v1439, %v1439
      %s1447 = scalar_lea.vmem %s8, 8
      %v1448 = vld [vmem:[%s1447] sm:$0xf]
      %v1450 = vsel %vm391, %v1448, 0
      %v1453 = vsel %vm395, %v1444, 0
      %v1456 = vsel %vm395, %v1445, 0
      %v1459 = vsel %vm395, %v1446, 0
      %1461 = vmatpush.bf16.msra.mxu0 0
      %1462 = vmatpush.bf16.msra.mxu0 0
      %1463 = vmatpush.bf16.msra.mxu0 0
      %1464 = vmatpush.bf16.msra.mxu0 0
      %1465 = vmatpush.bf16.msra.mxu0 0
      %1466 = vmatpush.bf16.msra.mxu0 0
      %1467 = vmatpush.bf16.msra.mxu0 0
      %1468 = vmatpush.bf16.msra.mxu0 %v1453
      %1469 = vmatmul.bf16.gmra.mxu0 %v1450
      %v1470 = vpop.f32.mrf.mxu0
      %v1471 = vadd.f32 0.0, %v1470
      %v1472 = vpop.f32.mrf.mxu0
      %1473 = vdwg.mxu0
      %1474 = vmatpush.bf16.msra.mxu0 0
      %1475 = vmatpush.bf16.msra.mxu0 0
      %1476 = vmatpush.bf16.msra.mxu0 0
      %1477 = vmatpush.bf16.msra.mxu0 0
      %1478 = vmatpush.bf16.msra.mxu0 0
      %1479 = vmatpush.bf16.msra.mxu0 0
      %1480 = vmatpush.bf16.msra.mxu0 0
      %1481 = vmatpush.bf16.msra.mxu0 %v1456
      %1482 = vmatmul.bf16.gmra.mxu0 %v1450
      %v1483 = vpop.f32.mrf.mxu0
      %v1484 = vadd.f32 0.0, %v1483
      %v1485 = vpop.f32.mrf.mxu0
      %1486 = vdwg.mxu0
      %1487 = vmatpush.bf16.msra.mxu0 0
      %1488 = vmatpush.bf16.msra.mxu0 0
      %1489 = vmatpush.bf16.msra.mxu0 0
      %1490 = vmatpush.bf16.msra.mxu0 0
      %1491 = vmatpush.bf16.msra.mxu0 0
      %1492 = vmatpush.bf16.msra.mxu0 0
      %1493 = vmatpush.bf16.msra.mxu0 0
      %1494 = vmatpush.bf16.msra.mxu0 %v1459
      %1495 = vmatmul.bf16.gmra.mxu0 %v1450
      %v1496 = vpop.f32.mrf.mxu0
      %v1497 = vadd.f32 0.0, %v1496
      %v1498 = vpop.f32.mrf.mxu0
      %1499 = vdwg.mxu0
      %v1500 = vadd.f32 %v1402, %v1471
      %v1501 = vadd.f32 %v1415, %v1484
      %v1502 = vadd.f32 %v1428, %v1497
      %1503 = vrot.lane.b32.xlu0 %v1290, 1
      %v1504 = vpop.permute.xlu0 %1503
      %1506 = vrot.lane.b32.xlu0 %v1288, 1
      %v1507 = vpop.permute.xlu0 %1506
      %1508 = vrot.lane.b32.xlu0 %v1289, 1
      %v1509 = vpop.permute.xlu0 %1508
      %v1510 = vsel %vm802, %v1507, %v1509
      %v1511 = vsel %vm802, %v1509, %v1504
      %v1515 = vsel %vm802, %v1504, %v1507
      %v1516 = vpack.c.bf16 %v1515, %v1515
      %v1517 = vpack.c.bf16 %v1510, %v1510
      %v1518 = vpack.c.bf16 %v1511, %v1511
      %s1519 = scalar_lea.vmem %s8, 12
      %v1520 = vld [vmem:[%s1519] sm:$0xf]
      %v1522 = vsel %vm391, %v1520, 0
      %v1525 = vsel %vm395, %v1516, 0
      %v1528 = vsel %vm395, %v1517, 0
      %v1531 = vsel %vm395, %v1518, 0
      %1533 = vmatpush.bf16.msra.mxu0 0
      %1534 = vmatpush.bf16.msra.mxu0 0
      %1535 = vmatpush.bf16.msra.mxu0 0
      %1536 = vmatpush.bf16.msra.mxu0 0
      %1537 = vmatpush.bf16.msra.mxu0 0
      %1538 = vmatpush.bf16.msra.mxu0 0
      %1539 = vmatpush.bf16.msra.mxu0 0
      %1540 = vmatpush.bf16.msra.mxu0 %v1525
      %1541 = vmatmul.bf16.gmra.mxu0 %v1522
      %v1542 = vpop.f32.mrf.mxu0
      %v1543 = vadd.f32 0.0, %v1542
      %v1544 = vpop.f32.mrf.mxu0
      %1545 = vdwg.mxu0
      %1546 = vmatpush.bf16.msra.mxu0 0
      %1547 = vmatpush.bf16.msra.mxu0 0
      %1548 = vmatpush.bf16.msra.mxu0 0
      %1549 = vmatpush.bf16.msra.mxu0 0
      %1550 = vmatpush.bf16.msra.mxu0 0
      %1551 = vmatpush.bf16.msra.mxu0 0
      %1552 = vmatpush.bf16.msra.mxu0 0
      %1553 = vmatpush.bf16.msra.mxu0 %v1528
      %1554 = vmatmul.bf16.gmra.mxu0 %v1522
      %v1555 = vpop.f32.mrf.mxu0
      %v1556 = vadd.f32 0.0, %v1555
      %v1557 = vpop.f32.mrf.mxu0
      %1558 = vdwg.mxu0
      %1559 = vmatpush.bf16.msra.mxu0 0
      %1560 = vmatpush.bf16.msra.mxu0 0
      %1561 = vmatpush.bf16.msra.mxu0 0
      %1562 = vmatpush.bf16.msra.mxu0 0
      %1563 = vmatpush.bf16.msra.mxu0 0
      %1564 = vmatpush.bf16.msra.mxu0 0
      %1565 = vmatpush.bf16.msra.mxu0 0
      %1566 = vmatpush.bf16.msra.mxu0 %v1531
      %1567 = vmatmul.bf16.gmra.mxu0 %v1522
      %v1568 = vpop.f32.mrf.mxu0
      %v1569 = vadd.f32 0.0, %v1568
      %v1570 = vpop.f32.mrf.mxu0
      %1571 = vdwg.mxu0
      %v1572 = vadd.f32 %v1500, %v1543
      %v1573 = vadd.f32 %v1501, %v1556
      %v1574 = vadd.f32 %v1502, %v1569
      %v1575 = vpack.c.bf16 %v1288, %v1288
      %v1576 = vpack.c.bf16 %v1289, %v1289
      %v1577 = vpack.c.bf16 %v1290, %v1290
      %s1578 = scalar_lea.vmem %s8, 16
      %v1579 = vld [vmem:[%s1578] sm:$0xf]
      %v1581 = vsel %vm391, %v1579, 0
      %v1584 = vsel %vm395, %v1575, 0
      %v1587 = vsel %vm395, %v1576, 0
      %v1590 = vsel %vm395, %v1577, 0
      %1592 = vmatpush.bf16.msra.mxu0 0
      %1593 = vmatpush.bf16.msra.mxu0 0
      %1594 = vmatpush.bf16.msra.mxu0 0
      %1595 = vmatpush.bf16.msra.mxu0 0
      %1596 = vmatpush.bf16.msra.mxu0 0
      %1597 = vmatpush.bf16.msra.mxu0 0
      %1598 = vmatpush.bf16.msra.mxu0 0
      %1599 = vmatpush.bf16.msra.mxu0 %v1584
      %1600 = vmatmul.bf16.gmra.mxu0 %v1581
      %v1601 = vpop.f32.mrf.mxu0
      %v1602 = vadd.f32 0.0, %v1601
      %v1603 = vpop.f32.mrf.mxu0
      %1604 = vdwg.mxu0
      %1605 = vmatpush.bf16.msra.mxu0 0
      %1606 = vmatpush.bf16.msra.mxu0 0
      %1607 = vmatpush.bf16.msra.mxu0 0
      %1608 = vmatpush.bf16.msra.mxu0 0
      %1609 = vmatpush.bf16.msra.mxu0 0
      %1610 = vmatpush.bf16.msra.mxu0 0
      %1611 = vmatpush.bf16.msra.mxu0 0
      %1612 = vmatpush.bf16.msra.mxu0 %v1587
      %1613 = vmatmul.bf16.gmra.mxu0 %v1581
      %v1614 = vpop.f32.mrf.mxu0
      %v1615 = vadd.f32 0.0, %v1614
      %v1616 = vpop.f32.mrf.mxu0
      %1617 = vdwg.mxu0
      %1618 = vmatpush.bf16.msra.mxu0 0
      %1619 = vmatpush.bf16.msra.mxu0 0
      %1620 = vmatpush.bf16.msra.mxu0 0
      %1621 = vmatpush.bf16.msra.mxu0 0
      %1622 = vmatpush.bf16.msra.mxu0 0
      %1623 = vmatpush.bf16.msra.mxu0 0
      %1624 = vmatpush.bf16.msra.mxu0 0
      %1625 = vmatpush.bf16.msra.mxu0 %v1590
      %1626 = vmatmul.bf16.gmra.mxu0 %v1581
      %v1627 = vpop.f32.mrf.mxu0
      %v1628 = vadd.f32 0.0, %v1627
      %v1629 = vpop.f32.mrf.mxu0
      %1630 = vdwg.mxu0
      %v1631 = vadd.f32 %v1572, %v1602
      %v1632 = vadd.f32 %v1573, %v1615
      %v1633 = vadd.f32 %v1574, %v1628
      %1634 = vrot.lane.b32.xlu0 %v1288, 127
      %v1635 = vpop.permute.xlu0 %1634
      %1636 = vrot.lane.b32.xlu0 %v1289, 127
      %v1637 = vpop.permute.xlu0 %1636
      %1638 = vrot.lane.b32.xlu0 %v1290, 127
      %v1639 = vpop.permute.xlu0 %1638
      %v1640 = vsel %vm933, %v1635, %v1637
      %v1641 = vsel %vm933, %v1637, %v1639
      %v1646 = vsel %vm933, %v1639, %v1635
      %v1647 = vpack.c.bf16 %v1640, %v1640
      %v1648 = vpack.c.bf16 %v1641, %v1641
      %v1649 = vpack.c.bf16 %v1646, %v1646
      %s1650 = scalar_lea.vmem %s8, 20
      %v1651 = vld [vmem:[%s1650] sm:$0xf]
      %v1653 = vsel %vm391, %v1651, 0
      %v1656 = vsel %vm395, %v1647, 0
      %v1659 = vsel %vm395, %v1648, 0
      %v1662 = vsel %vm395, %v1649, 0
      %1664 = vmatpush.bf16.msra.mxu0 0
      %1665 = vmatpush.bf16.msra.mxu0 0
      %1666 = vmatpush.bf16.msra.mxu0 0
      %1667 = vmatpush.bf16.msra.mxu0 0
      %1668 = vmatpush.bf16.msra.mxu0 0
      %1669 = vmatpush.bf16.msra.mxu0 0
      %1670 = vmatpush.bf16.msra.mxu0 0
      %1671 = vmatpush.bf16.msra.mxu0 %v1656
      %1672 = vmatmul.bf16.gmra.mxu0 %v1653
      %v1673 = vpop.f32.mrf.mxu0
      %v1674 = vadd.f32 0.0, %v1673
      %v1675 = vpop.f32.mrf.mxu0
      %1676 = vdwg.mxu0
      %1677 = vmatpush.bf16.msra.mxu0 0
      %1678 = vmatpush.bf16.msra.mxu0 0
      %1679 = vmatpush.bf16.msra.mxu0 0
      %1680 = vmatpush.bf16.msra.mxu0 0
      %1681 = vmatpush.bf16.msra.mxu0 0
      %1682 = vmatpush.bf16.msra.mxu0 0
      %1683 = vmatpush.bf16.msra.mxu0 0
      %1684 = vmatpush.bf16.msra.mxu0 %v1659
      %1685 = vmatmul.bf16.gmra.mxu0 %v1653
      %v1686 = vpop.f32.mrf.mxu0
      %v1687 = vadd.f32 0.0, %v1686
      %v1688 = vpop.f32.mrf.mxu0
      %1689 = vdwg.mxu0
      %1690 = vmatpush.bf16.msra.mxu0 0
      %1691 = vmatpush.bf16.msra.mxu0 0
      %1692 = vmatpush.bf16.msra.mxu0 0
      %1693 = vmatpush.bf16.msra.mxu0 0
      %1694 = vmatpush.bf16.msra.mxu0 0
      %1695 = vmatpush.bf16.msra.mxu0 0
      %1696 = vmatpush.bf16.msra.mxu0 0
      %1697 = vmatpush.bf16.msra.mxu0 %v1662
      %1698 = vmatmul.bf16.gmra.mxu0 %v1653
      %v1699 = vpop.f32.mrf.mxu0
      %v1700 = vadd.f32 0.0, %v1699
      %v1701 = vpop.f32.mrf.mxu0
      %1702 = vdwg.mxu0
      %v1703 = vadd.f32 %v1631, %v1674
      %v1704 = vadd.f32 %v1632, %v1687
      %v1705 = vadd.f32 %v1633, %v1700
      %1706 = vrot.lane.b32.xlu0 %v1288, 111
      %v1707 = vpop.permute.xlu0 %1706
      %1708 = vrot.lane.b32.xlu0 %v1289, 111
      %v1709 = vpop.permute.xlu0 %1708
      %1710 = vrot.lane.b32.xlu0 %v1290, 111
      %v1711 = vpop.permute.xlu0 %1710
      %v1712 = vsel %vm1006, %v1707, %v1709
      %v1713 = vsel %vm1006, %v1709, %v1711
      %v1718 = vsel %vm1006, %v1711, %v1707
      %v1719 = vpack.c.bf16 %v1712, %v1712
      %v1720 = vpack.c.bf16 %v1713, %v1713
      %v1721 = vpack.c.bf16 %v1718, %v1718
      %s1722 = scalar_lea.vmem %s8, 24
      %v1723 = vld [vmem:[%s1722] sm:$0xf]
      %v1725 = vsel %vm391, %v1723, 0
      %v1728 = vsel %vm395, %v1719, 0
      %v1731 = vsel %vm395, %v1720, 0
      %v1734 = vsel %vm395, %v1721, 0
      %1736 = vmatpush.bf16.msra.mxu0 0
      %1737 = vmatpush.bf16.msra.mxu0 0
      %1738 = vmatpush.bf16.msra.mxu0 0
      %1739 = vmatpush.bf16.msra.mxu0 0
      %1740 = vmatpush.bf16.msra.mxu0 0
      %1741 = vmatpush.bf16.msra.mxu0 0
      %1742 = vmatpush.bf16.msra.mxu0 0
      %1743 = vmatpush.bf16.msra.mxu0 %v1728
      %1744 = vmatmul.bf16.gmra.mxu0 %v1725
      %v1745 = vpop.f32.mrf.mxu0
      %v1746 = vadd.f32 0.0, %v1745
      %v1747 = vpop.f32.mrf.mxu0
      %1748 = vdwg.mxu0
      %1749 = vmatpush.bf16.msra.mxu0 0
      %1750 = vmatpush.bf16.msra.mxu0 0
      %1751 = vmatpush.bf16.msra.mxu0 0
      %1752 = vmatpush.bf16.msra.mxu0 0
      %1753 = vmatpush.bf16.msra.mxu0 0
      %1754 = vmatpush.bf16.msra.mxu0 0
      %1755 = vmatpush.bf16.msra.mxu0 0
      %1756 = vmatpush.bf16.msra.mxu0 %v1731
      %1757 = vmatmul.bf16.gmra.mxu0 %v1725
      %v1758 = vpop.f32.mrf.mxu0
      %v1759 = vadd.f32 0.0, %v1758
      %v1760 = vpop.f32.mrf.mxu0
      %1761 = vdwg.mxu0
      %1762 = vmatpush.bf16.msra.mxu0 0
      %1763 = vmatpush.bf16.msra.mxu0 0
      %1764 = vmatpush.bf16.msra.mxu0 0
      %1765 = vmatpush.bf16.msra.mxu0 0
      %1766 = vmatpush.bf16.msra.mxu0 0
      %1767 = vmatpush.bf16.msra.mxu0 0
      %1768 = vmatpush.bf16.msra.mxu0 0
      %1769 = vmatpush.bf16.msra.mxu0 %v1734
      %1770 = vmatmul.bf16.gmra.mxu0 %v1725
      %v1771 = vpop.f32.mrf.mxu0
      %v1772 = vadd.f32 0.0, %v1771
      %v1773 = vpop.f32.mrf.mxu0
      %1774 = vdwg.mxu0
      %v1775 = vadd.f32 %v1703, %v1746
      %v1776 = vadd.f32 %v1704, %v1759
      %v1777 = vadd.f32 %v1705, %v1772
      %1778 = vrot.lane.b32.xlu0 %v1288, 110
      %v1779 = vpop.permute.xlu0 %1778
      %1780 = vrot.lane.b32.xlu0 %v1289, 110
      %v1781 = vpop.permute.xlu0 %1780
      %1782 = vrot.lane.b32.xlu0 %v1290, 110
      %v1783 = vpop.permute.xlu0 %1782
      %v1784 = vsel %vm1079, %v1779, %v1781
      %v1785 = vsel %vm1079, %v1781, %v1783
      %v1790 = vsel %vm1079, %v1783, %v1779
      %v1791 = vpack.c.bf16 %v1784, %v1784
      %v1792 = vpack.c.bf16 %v1785, %v1785
      %v1793 = vpack.c.bf16 %v1790, %v1790
      %s1794 = scalar_lea.vmem %s8, 28
      %v1795 = vld [vmem:[%s1794] sm:$0xf]
      %v1797 = vsel %vm391, %v1795, 0
      %v1800 = vsel %vm395, %v1791, 0
      %v1803 = vsel %vm395, %v1792, 0
      %v1806 = vsel %vm395, %v1793, 0
      %1808 = vmatpush.bf16.msra.mxu0 0
      %1809 = vmatpush.bf16.msra.mxu0 0
      %1810 = vmatpush.bf16.msra.mxu0 0
      %1811 = vmatpush.bf16.msra.mxu0 0
      %1812 = vmatpush.bf16.msra.mxu0 0
      %1813 = vmatpush.bf16.msra.mxu0 0
      %1814 = vmatpush.bf16.msra.mxu0 0
      %1815 = vmatpush.bf16.msra.mxu0 %v1800
      %1816 = vmatmul.bf16.gmra.mxu0 %v1797
      %v1817 = vpop.f32.mrf.mxu0
      %v1818 = vadd.f32 0.0, %v1817
      %v1819 = vpop.f32.mrf.mxu0
      %1820 = vdwg.mxu0
      %1821 = vmatpush.bf16.msra.mxu0 0
      %1822 = vmatpush.bf16.msra.mxu0 0
      %1823 = vmatpush.bf16.msra.mxu0 0
      %1824 = vmatpush.bf16.msra.mxu0 0
      %1825 = vmatpush.bf16.msra.mxu0 0
      %1826 = vmatpush.bf16.msra.mxu0 0
      %1827 = vmatpush.bf16.msra.mxu0 0
      %1828 = vmatpush.bf16.msra.mxu0 %v1803
      %1829 = vmatmul.bf16.gmra.mxu0 %v1797
      %v1830 = vpop.f32.mrf.mxu0
      %v1831 = vadd.f32 0.0, %v1830
      %v1832 = vpop.f32.mrf.mxu0
      %1833 = vdwg.mxu0
      %1834 = vmatpush.bf16.msra.mxu0 0
      %1835 = vmatpush.bf16.msra.mxu0 0
      %1836 = vmatpush.bf16.msra.mxu0 0
      %1837 = vmatpush.bf16.msra.mxu0 0
      %1838 = vmatpush.bf16.msra.mxu0 0
      %1839 = vmatpush.bf16.msra.mxu0 0
      %1840 = vmatpush.bf16.msra.mxu0 0
      %1841 = vmatpush.bf16.msra.mxu0 %v1806
      %1842 = vmatmul.bf16.gmra.mxu0 %v1797
      %v1843 = vpop.f32.mrf.mxu0
      %v1844 = vadd.f32 0.0, %v1843
      %v1845 = vpop.f32.mrf.mxu0
      %1846 = vdwg.mxu0
      %v1847 = vadd.f32 %v1775, %v1818
      %v1848 = vadd.f32 %v1776, %v1831
      %v1849 = vadd.f32 %v1777, %v1844
      %1850 = vrot.lane.b32.xlu0 %v1288, 109
      %v1851 = vpop.permute.xlu0 %1850
      %1852 = vrot.lane.b32.xlu0 %v1289, 109
      %v1853 = vpop.permute.xlu0 %1852
      %1854 = vrot.lane.b32.xlu0 %v1290, 109
      %v1855 = vpop.permute.xlu0 %1854
      %v1856 = vsel %vm1152, %v1851, %v1853
      %v1857 = vsel %vm1152, %v1853, %v1855
      %v1862 = vsel %vm1152, %v1855, %v1851
      %v1863 = vpack.c.bf16 %v1856, %v1856
      %v1864 = vpack.c.bf16 %v1857, %v1857
      %v1865 = vpack.c.bf16 %v1862, %v1862
      %s1866 = scalar_lea.vmem %s8, 32
      %v1867 = vld [vmem:[%s1866] sm:$0xf]
      %v1869 = vsel %vm391, %v1867, 0
      %v1872 = vsel %vm395, %v1863, 0
      %v1875 = vsel %vm395, %v1864, 0
      %v1878 = vsel %vm395, %v1865, 0
      %1880 = vmatpush.bf16.msra.mxu0 0
      %1881 = vmatpush.bf16.msra.mxu0 0
      %1882 = vmatpush.bf16.msra.mxu0 0
      %1883 = vmatpush.bf16.msra.mxu0 0
      %1884 = vmatpush.bf16.msra.mxu0 0
      %1885 = vmatpush.bf16.msra.mxu0 0
      %1886 = vmatpush.bf16.msra.mxu0 0
      %1887 = vmatpush.bf16.msra.mxu0 %v1872
      %1888 = vmatmul.bf16.gmra.mxu0 %v1869
      %v1889 = vpop.f32.mrf.mxu0
      %v1890 = vadd.f32 0.0, %v1889
      %v1891 = vpop.f32.mrf.mxu0
      %1892 = vdwg.mxu0
      %1893 = vmatpush.bf16.msra.mxu0 0
      %1894 = vmatpush.bf16.msra.mxu0 0
      %1895 = vmatpush.bf16.msra.mxu0 0
      %1896 = vmatpush.bf16.msra.mxu0 0
      %1897 = vmatpush.bf16.msra.mxu0 0
      %1898 = vmatpush.bf16.msra.mxu0 0
      %1899 = vmatpush.bf16.msra.mxu0 0
      %1900 = vmatpush.bf16.msra.mxu0 %v1875
      %1901 = vmatmul.bf16.gmra.mxu0 %v1869
      %v1902 = vpop.f32.mrf.mxu0
      %v1903 = vadd.f32 0.0, %v1902
      %v1904 = vpop.f32.mrf.mxu0
      %1905 = vdwg.mxu0
      %1906 = vmatpush.bf16.msra.mxu0 0
      %1907 = vmatpush.bf16.msra.mxu0 0
      %1908 = vmatpush.bf16.msra.mxu0 0
      %1909 = vmatpush.bf16.msra.mxu0 0
      %1910 = vmatpush.bf16.msra.mxu0 0
      %1911 = vmatpush.bf16.msra.mxu0 0
      %1912 = vmatpush.bf16.msra.mxu0 0
      %1913 = vmatpush.bf16.msra.mxu0 %v1878
      %1914 = vmatmul.bf16.gmra.mxu0 %v1869
      %v1915 = vpop.f32.mrf.mxu0
      %v1916 = vadd.f32 0.0, %v1915
      %v1917 = vpop.f32.mrf.mxu0
      %1918 = vdwg.mxu0
      %v1919 = vadd.f32 %v1847, %v1890
      %v1920 = vadd.f32 %v1848, %v1903
      %v1921 = vadd.f32 %v1849, %v1916
      %v1922 = vld [vmem:[%s9] sm:$0xff]
      %1924 = vset.pattern.permute.xlu0 0
      %1925 = vperm.xlu0 %1924, %v1922
      %v1926 = vpop.permute.xlu0 %1925
      %v1928 = vadd.f32 %v1919, %v1926
      %v1929 = vadd.f32 %v1920, %v1926
      %v1930 = vadd.f32 %v1921, %v1926
      %v1931 = vxor.u32 %v1928, 2147483648
      %v1932 = vxor.u32 %v1929, 2147483648
      %v1933 = vxor.u32 %v1930, 2147483648
      %v1934 = vmul.f32 %v1931, 1.442695
      %v1935 = vpow.pop %v1934
      %v1936 = vmul.f32 %v1932, 1.442695
      %v1937 = vpow.pop %v1936
      %v1938 = vmul.f32 %v1933, 1.442695
      %v1939 = vpow.pop %v1938
      %v1940 = vadd.f32 %v1935, 1.0
      %v1941 = vadd.f32 %v1937, 1.0
      %v1942 = vadd.f32 %v1939, 1.0
      %v1943 = vrcp.pop %v1940
      %v1944 = vmul.f32 %v1940, %v1943
      %v1945 = vsub.f32 1.0, %v1944
      %v1946 = vmul.f32 %v1943, %v1945
      %v1947 = vadd.f32 %v1943, %v1946
      %vm1948 = vweird.f32 %v1940
      %vm1949 = vweird.f32 %v1943
      %vm1950 = vmor %vm1948, %vm1949
      %v1951 = vsel %vm1950, %v1943, %v1947
      %v1952 = vand.u32 2147483647, %v1940
      %vm1953 = vcmp.eq.f32.partialorder %v1952, 8.507059e+37
      %v1954 = vand.u32 %v1940, 2147483648
      %v1955 = vor.u32 1.1754944e-38, %v1954
      %v1956 = vsel %vm1953, %v1955, %v1951
      %v1957 = vmul.f32 1.0, %v1956
      %v1958 = vrcp.pop %v1941
      %v1959 = vmul.f32 %v1941, %v1958
      %v1960 = vsub.f32 1.0, %v1959
      %v1961 = vmul.f32 %v1958, %v1960
      %v1962 = vadd.f32 %v1958, %v1961
      %vm1963 = vweird.f32 %v1941
      %vm1964 = vweird.f32 %v1958
      %vm1965 = vmor %vm1963, %vm1964
      %v1966 = vsel %vm1965, %v1958, %v1962
      %v1967 = vand.u32 2147483647, %v1941
      %vm1968 = vcmp.eq.f32.partialorder %v1967, 8.507059e+37
      %v1969 = vand.u32 %v1941, 2147483648
      %v1970 = vor.u32 1.1754944e-38, %v1969
      %v1971 = vsel %vm1968, %v1970, %v1966
      %v1972 = vmul.f32 1.0, %v1971
      %v1973 = vrcp.pop %v1942
      %v1974 = vmul.f32 %v1942, %v1973
      %v1975 = vsub.f32 1.0, %v1974
      %v1976 = vmul.f32 %v1973, %v1975
      %v1977 = vadd.f32 %v1973, %v1976
      %vm1978 = vweird.f32 %v1942
      %vm1979 = vweird.f32 %v1973
      %vm1980 = vmor %vm1978, %vm1979
      %v1981 = vsel %vm1980, %v1973, %v1977
      %v1982 = vand.u32 2147483647, %v1942
      %vm1983 = vcmp.eq.f32.partialorder %v1982, 8.507059e+37
      %v1984 = vand.u32 %v1942, 2147483648
      %v1985 = vor.u32 1.1754944e-38, %v1984
      %v1986 = vsel %vm1983, %v1985, %v1981
      %v1987 = vmul.f32 1.0, %v1986
      %v1988 = vmul.f32 %v1928, %v1957
      %v1989 = vmul.f32 %v1929, %v1972
      %v1990 = vmul.f32 %v1930, %v1987
      %v1991 = vmul.f32 %v1988, %v568
      %v1992 = vmul.f32 %v1989, %v569
      %v1993 = vmul.f32 %v1990, %v570
      %v1994 = vld [vmem:[%s4] sm:$0xf]
      %v1995 = vpack.c.bf16 %v574, %v574
      %v1996 = vpack.c.bf16 %v575, %v575
      %v1997 = vpack.c.bf16 %v576, %v576
      %s1998 = scalar_lea.vmem %s4, 4
      %v1999 = vld [vmem:[%s1998] sm:$0xf]
      %v2001 = vsel %vm391, %v1999, 0
      %2003 = vmatpush.bf16.msra.mxu0 0
      %2004 = vmatpush.bf16.msra.mxu0 0
      %2005 = vmatpush.bf16.msra.mxu0 0
      %2006 = vmatpush.bf16.msra.mxu0 0
      %2007 = vmatpush.bf16.msra.mxu0 0
      %2008 = vmatpush.bf16.msra.mxu0 0
      %2009 = vmatpush.bf16.msra.mxu0 0
      %2010 = vmatpush.bf16.msra.mxu0 %v877
      %2011 = vmatmul.bf16.gmra.mxu0 %v2001
      %v2012 = vpop.f32.mrf.mxu0
      %v2013 = vadd.f32 0.0, %v2012
      %v2014 = vpop.f32.mrf.mxu0
      %2015 = vdwg.mxu0
      %2016 = vmatpush.bf16.msra.mxu0 0
      %2017 = vmatpush.bf16.msra.mxu0 0
      %2018 = vmatpush.bf16.msra.mxu0 0
      %2019 = vmatpush.bf16.msra.mxu0 0
      %2020 = vmatpush.bf16.msra.mxu0 0
      %2021 = vmatpush.bf16.msra.mxu0 0
      %2022 = vmatpush.bf16.msra.mxu0 0
      %2023 = vmatpush.bf16.msra.mxu0 %v880
      %2024 = vmatmul.bf16.gmra.mxu0 %v2001
      %v2025 = vpop.f32.mrf.mxu0
      %v2026 = vadd.f32 0.0, %v2025
      %v2027 = vpop.f32.mrf.mxu0
      %2028 = vdwg.mxu0
      %2029 = vmatpush.bf16.msra.mxu0 0
      %2030 = vmatpush.bf16.msra.mxu0 0
      %2031 = vmatpush.bf16.msra.mxu0 0
      %2032 = vmatpush.bf16.msra.mxu0 0
      %2033 = vmatpush.bf16.msra.mxu0 0
      %2034 = vmatpush.bf16.msra.mxu0 0
      %2035 = vmatpush.bf16.msra.mxu0 0
      %2036 = vmatpush.bf16.msra.mxu0 %v883
      %2037 = vmatmul.bf16.gmra.mxu0 %v2001
      %v2038 = vpop.f32.mrf.mxu0
      %v2039 = vadd.f32 0.0, %v2038
      %v2040 = vpop.f32.mrf.mxu0
      %2041 = vdwg.mxu0
      %v2043 = vsel %vm391, %v1994, 0
      %v2046 = vsel %vm395, %v1995, 0
      %v2049 = vsel %vm395, %v1996, 0
      %v2052 = vsel %vm395, %v1997, 0
      %2054 = vmatpush.bf16.msra.mxu0 0
      %2055 = vmatpush.bf16.msra.mxu0 0
      %2056 = vmatpush.bf16.msra.mxu0 0
      %2057 = vmatpush.bf16.msra.mxu0 0
      %2058 = vmatpush.bf16.msra.mxu0 0
      %2059 = vmatpush.bf16.msra.mxu0 0
      %2060 = vmatpush.bf16.msra.mxu0 0
      %2061 = vmatpush.bf16.msra.mxu0 %v2046
      %2062 = vmatmul.bf16.gmra.mxu0 %v2043
      %v2063 = vpop.f32.mrf.mxu0
      %v2064 = vadd.f32 %v2013, %v2063
      %v2065 = vpop.f32.mrf.mxu0
      %2066 = vdwg.mxu0
      %2067 = vmatpush.bf16.msra.mxu0 0
      %2068 = vmatpush.bf16.msra.mxu0 0
      %2069 = vmatpush.bf16.msra.mxu0 0
      %2070 = vmatpush.bf16.msra.mxu0 0
      %2071 = vmatpush.bf16.msra.mxu0 0
      %2072 = vmatpush.bf16.msra.mxu0 0
      %2073 = vmatpush.bf16.msra.mxu0 0
      %2074 = vmatpush.bf16.msra.mxu0 %v2049
      %2075 = vmatmul.bf16.gmra.mxu0 %v2043
      %v2076 = vpop.f32.mrf.mxu0
      %v2077 = vadd.f32 %v2026, %v2076
      %v2078 = vpop.f32.mrf.mxu0
      %2079 = vdwg.mxu0
      %2080 = vmatpush.bf16.msra.mxu0 0
      %2081 = vmatpush.bf16.msra.mxu0 0
      %2082 = vmatpush.bf16.msra.mxu0 0
      %2083 = vmatpush.bf16.msra.mxu0 0
      %2084 = vmatpush.bf16.msra.mxu0 0
      %2085 = vmatpush.bf16.msra.mxu0 0
      %2086 = vmatpush.bf16.msra.mxu0 0
      %2087 = vmatpush.bf16.msra.mxu0 %v2052
      %2088 = vmatmul.bf16.gmra.mxu0 %v2043
      %v2089 = vpop.f32.mrf.mxu0
      %v2090 = vadd.f32 %v2039, %v2089
      %v2091 = vpop.f32.mrf.mxu0
      %2092 = vdwg.mxu0
      %s2093 = scalar_lea.vmem %s4, 8
      %v2094 = vld [vmem:[%s2093] sm:$0xf]
      %v2095 = vpack.c.bf16 %v1991, %v1991
      %v2096 = vpack.c.bf16 %v1992, %v1992
      %v2097 = vpack.c.bf16 %v1993, %v1993
      %v2099 = vsel %vm391, %v2094, 0
      %v2102 = vsel %vm395, %v2095, 0
      %v2105 = vsel %vm395, %v2096, 0
      %v2108 = vsel %vm395, %v2097, 0
      %2110 = vmatpush.bf16.msra.mxu0 0
      %2111 = vmatpush.bf16.msra.mxu0 0
      %2112 = vmatpush.bf16.msra.mxu0 0
      %2113 = vmatpush.bf16.msra.mxu0 0
      %2114 = vmatpush.bf16.msra.mxu0 0
      %2115 = vmatpush.bf16.msra.mxu0 0
      %2116 = vmatpush.bf16.msra.mxu0 0
      %2117 = vmatpush.bf16.msra.mxu0 %v2102
      %2118 = vmatmul.bf16.gmra.mxu0 %v2099
      %v2119 = vpop.f32.mrf.mxu0
      %v2120 = vadd.f32 0.0, %v2119
      %v2121 = vpop.f32.mrf.mxu0
      %2122 = vdwg.mxu0
      %2123 = vmatpush.bf16.msra.mxu0 0
      %2124 = vmatpush.bf16.msra.mxu0 0
      %2125 = vmatpush.bf16.msra.mxu0 0
      %2126 = vmatpush.bf16.msra.mxu0 0
      %2127 = vmatpush.bf16.msra.mxu0 0
      %2128 = vmatpush.bf16.msra.mxu0 0
      %2129 = vmatpush.bf16.msra.mxu0 0
      %2130 = vmatpush.bf16.msra.mxu0 %v2105
      %2131 = vmatmul.bf16.gmra.mxu0 %v2099
      %v2132 = vpop.f32.mrf.mxu0
      %v2133 = vadd.f32 0.0, %v2132
      %v2134 = vpop.f32.mrf.mxu0
      %2135 = vdwg.mxu0
      %2136 = vmatpush.bf16.msra.mxu0 0
      %2137 = vmatpush.bf16.msra.mxu0 0
      %2138 = vmatpush.bf16.msra.mxu0 0
      %2139 = vmatpush.bf16.msra.mxu0 0
      %2140 = vmatpush.bf16.msra.mxu0 0
      %2141 = vmatpush.bf16.msra.mxu0 0
      %2142 = vmatpush.bf16.msra.mxu0 0
      %2143 = vmatpush.bf16.msra.mxu0 %v2108
      %2144 = vmatmul.bf16.gmra.mxu0 %v2099
      %v2145 = vpop.f32.mrf.mxu0
      %v2146 = vadd.f32 0.0, %v2145
      %v2147 = vpop.f32.mrf.mxu0
      %2148 = vdwg.mxu0
      %v2149 = vadd.f32 %v2064, %v2120
      %v2150 = vadd.f32 %v2077, %v2133
      %v2151 = vadd.f32 %v2090, %v2146
      %v2152 = vld [vmem:[%s5] sm:$0xff]
      %2154 = vset.pattern.permute.xlu0 0
      %2155 = vperm.xlu0 %2154, %v2152
      %v2156 = vpop.permute.xlu0 %2155
      %v2158 = vadd.f32 %v2149, %v2156
      %v2159 = vadd.f32 %v2150, %v2156
      %v2160 = vadd.f32 %v2151, %v2156
      %v2161 = vxor.u32 %v2158, 2147483648
      %v2162 = vxor.u32 %v2159, 2147483648
      %v2163 = vxor.u32 %v2160, 2147483648
      %v2164 = vmul.f32 %v2161, 1.442695
      %v2165 = vpow.pop %v2164
      %v2166 = vmul.f32 %v2162, 1.442695
      %v2167 = vpow.pop %v2166
      %v2168 = vmul.f32 %v2163, 1.442695
      %v2169 = vpow.pop %v2168
      %v2170 = vadd.f32 %v2165, 1.0
      %v2171 = vadd.f32 %v2167, 1.0
      %v2172 = vadd.f32 %v2169, 1.0
      %v2173 = vrcp.pop %v2170
      %v2174 = vmul.f32 %v2170, %v2173
      %v2175 = vsub.f32 1.0, %v2174
      %v2176 = vmul.f32 %v2173, %v2175
      %v2177 = vadd.f32 %v2173, %v2176
      %vm2178 = vweird.f32 %v2170
      %vm2179 = vweird.f32 %v2173
      %vm2180 = vmor %vm2178, %vm2179
      %v2181 = vsel %vm2180, %v2173, %v2177
      %v2182 = vand.u32 2147483647, %v2170
      %vm2183 = vcmp.eq.f32.partialorder %v2182, 8.507059e+37
      %v2184 = vand.u32 %v2170, 2147483648
      %v2185 = vor.u32 1.1754944e-38, %v2184
      %v2186 = vsel %vm2183, %v2185, %v2181
      %v2187 = vmul.f32 1.0, %v2186
      %v2188 = vrcp.pop %v2171
      %v2189 = vmul.f32 %v2171, %v2188
      %v2190 = vsub.f32 1.0, %v2189
      %v2191 = vmul.f32 %v2188, %v2190
      %v2192 = vadd.f32 %v2188, %v2191
      %vm2193 = vweird.f32 %v2171
      %vm2194 = vweird.f32 %v2188
      %vm2195 = vmor %vm2193, %vm2194
      %v2196 = vsel %vm2195, %v2188, %v2192
      %v2197 = vand.u32 2147483647, %v2171
      %vm2198 = vcmp.eq.f32.partialorder %v2197, 8.507059e+37
      %v2199 = vand.u32 %v2171, 2147483648
      %v2200 = vor.u32 1.1754944e-38, %v2199
      %v2201 = vsel %vm2198, %v2200, %v2196
      %v2202 = vmul.f32 1.0, %v2201
      %v2203 = vrcp.pop %v2172
      %v2204 = vmul.f32 %v2172, %v2203
      %v2205 = vsub.f32 1.0, %v2204
      %v2206 = vmul.f32 %v2203, %v2205
      %v2207 = vadd.f32 %v2203, %v2206
      %vm2208 = vweird.f32 %v2172
      %vm2209 = vweird.f32 %v2203
      %vm2210 = vmor %vm2208, %vm2209
      %v2211 = vsel %vm2210, %v2203, %v2207
      %v2212 = vand.u32 2147483647, %v2172
      %vm2213 = vcmp.eq.f32.partialorder %v2212, 8.507059e+37
      %v2214 = vand.u32 %v2172, 2147483648
      %v2215 = vor.u32 1.1754944e-38, %v2214
      %v2216 = vsel %vm2213, %v2215, %v2211
      %v2217 = vmul.f32 1.0, %v2216
      %v2218 = vmul.f32 %v2158, %v2187
      %v2219 = vmul.f32 %v2159, %v2202
      %v2220 = vmul.f32 %v2160, %v2217
      %v2221 = vpack.c.bf16 %v2219, %v2218
      %v2222 = vpack.c.bf16 %v2220, %v2220
      %2223 = vst [vmem:[%s359] sm:$0xff] %v2221
      %2224 = vst [vmem:[%s359 + $0x8] sm:$0xf] %v2222
      %p2225 = scmp.lt.s32.totalorder %s21, 1
      %s2226 = scalar_select %p2225, %s21, 1
      %s2227 = smul.addr %s2226, 3
      %s2228 = smul.addr %s2227, 4
      %s2229 = scalar_lea.vmem %s10, %s2228
      // Predicated region
      $region61: #{c2f_forward.1} parent=59 // pred_check
        %p2230 = pneg %p254
      $region62: #{c2f_forward.1} parent=59 // pred_check_branch
        %2232 = sbr.rel (%p2230) target = $region64
      $region63: #{c2f_forward.1} parent=59 // pred_region
        _
      $region64: #{c2f_forward.1} parent=59 // pred_fallthru
        _
    $region60: #{c2f_forward.1} parent=5 // pred_fallthru
      _
    %p2233 = scmp.le.s32.totalorder 2, %s16
    // Predicated region
    $region65: #{c2f_forward.1} parent=5 // pred_check
      %p2234 = pneg %p2233
    $region66: #{c2f_forward.1} parent=5 // pred_check_branch
      %2236 = sbr.rel (%p2234) target = $region68
    $region67: #{c2f_forward.1} parent=5 // pred_region
      %s2237 = ssub.s32 %s16, 2
      // Predicated region
      $region69: #{c2f_forward.1} parent=67 // pred_check
        %p2238 = pneg %p260
      $region70: #{c2f_forward.1} parent=67 // pred_check_branch
        %2240 = sbr.rel (%p2238) target = $region72
      $region71: #{c2f_forward.1} parent=67 // pred_region
        %p2241 = scmp.lt.s32.totalorder %s22, 1
        %s2242 = scalar_select %p2241, %s22, 1
        %s2243 = smul.addr %s2242, 3
        %s2244 = smul.addr %s2243, 4
        %s2245 = scalar_lea.vmem %s10, %s2244
      $region72: #{c2f_forward.1} parent=67 // pred_fallthru
        _
    $region68: #{c2f_forward.1} parent=5 // pred_fallthru
      _
  $region6: #{c2f_forward.1} parent=0 // loop_footer
    %s20 = sadd.s32 1, %s16
  $region7: #{c2f_forward.1} parent=0 // loop_footer_branch
    %15 = sbr.rel target = $region3
  $region8: #{c2f_forward.1} parent=0 // loop_exit
    _

</llo_original>
